<compile_context>
chip_gen: v6e
topology: v6e:2x2x1
jax: 0.10.0
libtpu: 0.0.40
codegen_flags: <defaults>
</compile_context>

<pallas_src>
import jax
import jax.numpy as jnp
from jax.experimental import pallas as pl
from jax.experimental.pallas import tpu as pltpu

HIDDEN = 256


def _round_up(x, m):
    return ((x + m - 1) // m) * m


def value_net_kernel(states_ref, goals_ref, w1s_ref, w1g_ref, b1_ref,
                     w2_ref, b2_ref, w3_ref, b3_ref, out_ref):
    # ---- Layer 1: split-W1 matmul avoids materializing cat([states, goals]).
    s = states_ref[...].astype(jnp.bfloat16)                         # (TB, S)
    g = goals_ref[...].astype(jnp.bfloat16)                          # (TB, S)
    h1 = jnp.dot(s, w1s_ref[...], preferred_element_type=jnp.float32)
    h1 = h1 + jnp.dot(g, w1g_ref[...], preferred_element_type=jnp.float32)
    h1 = jnp.maximum(h1 + b1_ref[...], 0.0)                          # (TB, 256) f32

    # ---- Layer 2: bf16 MXU matmul, f32 accumulation.
    h2 = jnp.dot(h1.astype(jnp.bfloat16), w2_ref[...],
                 preferred_element_type=jnp.float32)
    h2 = jnp.maximum(h2 + b2_ref[...], 0.0)                          # (TB, 256) f32

    # ---- Layer 3 (256 -> 1): VPU multiply + lane reduce (skips N=1 MXU push).
    v = jnp.sum(h2 * w3_ref[...], axis=-1, keepdims=True)            # (TB, 1)
    out_ref[...] = v + b3_ref[...]


def value_network_forward(states, goals, params, *, tile_b_max=1024):
    """states, goals: (B, state_size) float32. Returns (B, 1) float32."""
    w1s, w1g, b1, w2, b2, w3_row, b3 = params
    B, S = states.shape

    # Batch tile: multiple of 256 (fills MXU rows on v6e/v7x, 2x128 on v5e),
    # capped so double-buffered tiles + resident weights stay well under the
    # scoped VMEM default on every generation (incl. v7x's 64 MiB VMEM).
    tile_b = min(tile_b_max, _round_up(B, 256))
    padded_b = _round_up(B, tile_b)
    if padded_b != B:
        pad = padded_b - B
        states = jnp.pad(states, ((0, pad), (0, 0)))
        goals = jnp.pad(goals, ((0, pad), (0, 0)))

    grid = (padded_b // tile_b,)

    flops = 2 * padded_b * (2 * S * HIDDEN + HIDDEN * HIDDEN + HIDDEN)
    bytes_accessed = (
        2 * padded_b * S * 4          # states + goals (f32)
        + padded_b * 4                # output (f32)
        + 2 * S * HIDDEN * 2          # W1 halves (bf16)
        + HIDDEN * HIDDEN * 2         # W2 (bf16)
        + 2 * HIDDEN * 4              # b1, b2 (f32)
        + HIDDEN * 4 + 4)             # w3 row + b3 (f32)

    out = pl.pallas_call(
        value_net_kernel,
        out_shape=jax.ShapeDtypeStruct((padded_b, 1), jnp.float32),
        grid=grid,
        in_specs=[
            pl.BlockSpec((tile_b, S), lambda i: (i, 0)),        # states tile
            pl.BlockSpec((tile_b, S), lambda i: (i, 0)),        # goals tile
            pl.BlockSpec((S, HIDDEN), lambda i: (0, 0)),        # W1 states-half (resident)
            pl.BlockSpec((S, HIDDEN), lambda i: (0, 0)),        # W1 goals-half  (resident)
            pl.BlockSpec((1, HIDDEN), lambda i: (0, 0)),        # b1            (resident)
            pl.BlockSpec((HIDDEN, HIDDEN), lambda i: (0, 0)),   # W2            (resident)
            pl.BlockSpec((1, HIDDEN), lambda i: (0, 0)),        # b2            (resident)
            pl.BlockSpec((1, HIDDEN), lambda i: (0, 0)),        # w3 row        (resident)
            pl.BlockSpec((1, 1), lambda i: (0, 0)),             # b3            (resident)
        ],
        out_specs=pl.BlockSpec((tile_b, 1), lambda i: (i, 0)),
        compiler_params=pltpu.CompilerParams(
            dimension_semantics=("parallel",)),
        cost_estimate=pl.CostEstimate(
            flops=flops, transcendentals=0, bytes_accessed=bytes_accessed),
    )(states, goals, w1s, w1g, b1, w2, b2, w3_row, b3)

    return out[:B]


def init_params(key, state_size, hidden_size=HIDDEN):
    """Mirrors the module's weight_init: weights ~ Normal(0, sqrt(2/(fan_in+fan_out)));
    biases keep nn.Linear's default uniform(-1/sqrt(fan_in), 1/sqrt(fan_in)).
    Weights are returned pre-transposed (in, out); matmul weights in bf16."""
    in_dim = 2 * state_size
    k = jax.random.split(key, 6)

    def w_init(kk, fan_in, fan_out):
        std = jnp.sqrt(2.0 / (fan_in + fan_out))
        # PyTorch stores W as (out, in); return the transpose (in, out).
        w = std * jax.random.normal(kk, (fan_out, fan_in), dtype=jnp.float32)
        return w.T

    def b_init(kk, fan_in, fan_out):
        bound = 1.0 / jnp.sqrt(fan_in)
        return jax.random.uniform(kk, (1, fan_out), dtype=jnp.float32,
                                  minval=-bound, maxval=bound)

    w1t = w_init(k[0], in_dim, hidden_size)                 # (2S, 256)
    w1s = w1t[:state_size].astype(jnp.bfloat16)             # (S, 256)  states half
    w1g = w1t[state_size:].astype(jnp.bfloat16)             # (S, 256)  goals half
    b1 = b_init(k[1], in_dim, hidden_size)                  # (1, 256) f32
    w2 = w_init(k[2], hidden_size, hidden_size).astype(jnp.bfloat16)  # (256, 256)
    b2 = b_init(k[3], hidden_size, hidden_size)             # (1, 256) f32
    w3_row = w_init(k[4], hidden_size, 1).reshape(1, hidden_size)     # (1, 256) f32
    b3 = b_init(k[5], hidden_size, 1)                       # (1, 1) f32
    return (w1s, w1g, b1, w2, b2, w3_row, b3)


def value_network_ref(states, goals, params):
    """Pure-JAX reference performing the same bf16-matmul / f32-accumulate math."""
    w1s, w1g, b1, w2, b2, w3_row, b3 = params
    h1 = (jnp.dot(states.astype(jnp.bfloat16), w1s, preferred_element_type=jnp.float32)
          + jnp.dot(goals.astype(jnp.bfloat16), w1g, preferred_element_type=jnp.float32))
    h1 = jnp.maximum(h1 + b1, 0.0)
    h2 = jnp.dot(h1.astype(jnp.bfloat16), w2, preferred_element_type=jnp.float32)
    h2 = jnp.maximum(h2 + b2, 0.0)
    return jnp.sum(h2 * w3_row, axis=-1, keepdims=True) + b3


if __name__ == "__main__":
    batch = 8
    state_size = 16

    key = jax.random.PRNGKey(0)
    k_params, k_states, k_goals = jax.random.split(key, 3)

    params = init_params(k_params, state_size)
    states = jax.random.normal(k_states, (batch, state_size), dtype=jnp.float32)
    goals = jax.random.normal(k_goals, (batch, state_size), dtype=jnp.float32)

    out = value_network_forward(states, goals, params)
    out = jax.block_until_ready(out)

    ref = value_network_ref(states, goals, params)
    assert out.shape == (batch, 1)
    assert jnp.allclose(out, ref, atol=1e-2, rtol=1e-2), (out, ref)

    print("KERNEL_OK")
</pallas_src>

<mosaic_0001>
module attributes {stable_mosaic.version = 11 : i64} {
  func.func @value_net_kernel(%arg0: i32, %arg1: memref<256x16xf32, #tpu.memory_space<vmem>>, %arg2: memref<256x16xf32, #tpu.memory_space<vmem>>, %arg3: memref<16x256xbf16, #tpu.memory_space<vmem>>, %arg4: memref<16x256xbf16, #tpu.memory_space<vmem>>, %arg5: memref<1x256xf32, #tpu.memory_space<vmem>>, %arg6: memref<256x256xbf16, #tpu.memory_space<vmem>>, %arg7: memref<1x256xf32, #tpu.memory_space<vmem>>, %arg8: memref<1x256xf32, #tpu.memory_space<vmem>>, %arg9: memref<1x1xf32, #tpu.memory_space<vmem>>, %arg10: memref<256x1xf32, #tpu.memory_space<vmem>>) attributes {dimension_semantics = [#tpu.dimension_semantics<parallel>], iteration_bounds = array<i64: 1>, scalar_prefetch = 0 : i64, scratch_operands = 0 : i64, tpu.core_type = #tpu.core_type<tc>, window_params = [{transform_indices = @transform_0, window_bounds = array<i64: 256, 16>}, {transform_indices = @transform_1, window_bounds = array<i64: 256, 16>}, {pipeline_mode = #tpu.pipeline_mode<synchronous>, transform_indices = @transform_2, window_bounds = array<i64: 16, 256>}, {pipeline_mode = #tpu.pipeline_mode<synchronous>, transform_indices = @transform_3, window_bounds = array<i64: 16, 256>}, {pipeline_mode = #tpu.pipeline_mode<synchronous>, transform_indices = @transform_4, window_bounds = array<i64: 1, 256>}, {pipeline_mode = #tpu.pipeline_mode<synchronous>, transform_indices = @transform_5, window_bounds = array<i64: 256, 256>}, {pipeline_mode = #tpu.pipeline_mode<synchronous>, transform_indices = @transform_6, window_bounds = array<i64: 1, 256>}, {pipeline_mode = #tpu.pipeline_mode<synchronous>, transform_indices = @transform_7, window_bounds = array<i64: 1, 256>}, {pipeline_mode = #tpu.pipeline_mode<synchronous>, transform_indices = @transform_8, window_bounds = array<i64: 1, 1>}, {transform_indices = @transform_9, window_bounds = array<i64: 256, 1>}]} {
    %c0 = arith.constant 0 : index
    %c0_0 = arith.constant 0 : index
    %0 = vector.load %arg1[%c0, %c0_0] : memref<256x16xf32, #tpu.memory_space<vmem>>, vector<256x16xf32>
    %1 = arith.truncf %0 : vector<256x16xf32> to vector<256x16xbf16>
    %c0_1 = arith.constant 0 : index
    %c0_2 = arith.constant 0 : index
    %2 = vector.load %arg2[%c0_1, %c0_2] : memref<256x16xf32, #tpu.memory_space<vmem>>, vector<256x16xf32>
    %3 = arith.truncf %2 : vector<256x16xf32> to vector<256x16xbf16>
    %c0_3 = arith.constant 0 : index
    %c0_4 = arith.constant 0 : index
    %4 = vector.load %arg3[%c0_3, %c0_4] : memref<16x256xbf16, #tpu.memory_space<vmem>>, vector<16x256xbf16>
    %cst = arith.constant dense<0.000000e+00> : vector<256x256xf32>
    %5 = tpu.matmul %1, %4, %cst {dimension_numbers = #tpu.dot_dimension_numbers<[1], [0], [0], [1], [0, 0, 1, 1], [], []>} : vector<256x16xbf16>, vector<16x256xbf16>, vector<256x256xf32> -> vector<256x256xf32>
    %c0_5 = arith.constant 0 : index
    %c0_6 = arith.constant 0 : index
    %6 = vector.load %arg4[%c0_5, %c0_6] : memref<16x256xbf16, #tpu.memory_space<vmem>>, vector<16x256xbf16>
    %cst_7 = arith.constant dense<0.000000e+00> : vector<256x256xf32>
    %7 = tpu.matmul %3, %6, %cst_7 {dimension_numbers = #tpu.dot_dimension_numbers<[1], [0], [0], [1], [0, 0, 1, 1], [], []>} : vector<256x16xbf16>, vector<16x256xbf16>, vector<256x256xf32> -> vector<256x256xf32>
    %8 = arith.addf %5, %7 : vector<256x256xf32>
    %c0_8 = arith.constant 0 : index
    %c0_9 = arith.constant 0 : index
    %9 = vector.load %arg5[%c0_8, %c0_9] : memref<1x256xf32, #tpu.memory_space<vmem>>, vector<1x256xf32>
    %10 = vector.broadcast %9 : vector<1x256xf32> to vector<256x256xf32>
    %11 = arith.addf %8, %10 : vector<256x256xf32>
    %cst_10 = arith.constant 0.000000e+00 : f32
    %12 = vector.broadcast %cst_10 : f32 to vector<256x256xf32>
    %13 = arith.maximumf %11, %12 : vector<256x256xf32>
    %14 = arith.truncf %13 : vector<256x256xf32> to vector<256x256xbf16>
    %c0_11 = arith.constant 0 : index
    %c0_12 = arith.constant 0 : index
    %15 = vector.load %arg6[%c0_11, %c0_12] : memref<256x256xbf16, #tpu.memory_space<vmem>>, vector<256x256xbf16>
    %cst_13 = arith.constant dense<0.000000e+00> : vector<256x256xf32>
    %16 = tpu.matmul %14, %15, %cst_13 {dimension_numbers = #tpu.dot_dimension_numbers<[1], [0], [0], [1], [0, 0, 1, 1], [], []>} : vector<256x256xbf16>, vector<256x256xbf16>, vector<256x256xf32> -> vector<256x256xf32>
    %c0_14 = arith.constant 0 : index
    %c0_15 = arith.constant 0 : index
    %17 = vector.load %arg7[%c0_14, %c0_15] : memref<1x256xf32, #tpu.memory_space<vmem>>, vector<1x256xf32>
    %18 = vector.broadcast %17 : vector<1x256xf32> to vector<256x256xf32>
    %19 = arith.addf %16, %18 : vector<256x256xf32>
    %cst_16 = arith.constant 0.000000e+00 : f32
    %20 = vector.broadcast %cst_16 : f32 to vector<256x256xf32>
    %21 = arith.maximumf %19, %20 : vector<256x256xf32>
    %c0_17 = arith.constant 0 : index
    %c0_18 = arith.constant 0 : index
    %22 = vector.load %arg8[%c0_17, %c0_18] : memref<1x256xf32, #tpu.memory_space<vmem>>, vector<1x256xf32>
    %23 = vector.broadcast %22 : vector<1x256xf32> to vector<256x256xf32>
    %24 = arith.mulf %21, %23 : vector<256x256xf32>
    %cst_19 = arith.constant dense<0.000000e+00> : vector<256xf32>
    %25 = vector.multi_reduction <add>, %24, %cst_19 [1] : vector<256x256xf32> to vector<256xf32>
    %26 = vector.shape_cast %25 : vector<256xf32> to vector<256x1xf32>
    %c0_20 = arith.constant 0 : index
    %c0_21 = arith.constant 0 : index
    %27 = vector.load %arg9[%c0_20, %c0_21] : memref<1x1xf32, #tpu.memory_space<vmem>>, vector<1x1xf32>
    %28 = vector.broadcast %27 : vector<1x1xf32> to vector<256x1xf32>
    %29 = arith.addf %26, %28 : vector<256x1xf32>
    %c0_22 = arith.constant 0 : index
    %c0_23 = arith.constant 0 : index
    %30 = vector.load %arg10[%c0_22, %c0_23] : memref<256x1xf32, #tpu.memory_space<vmem>>, vector<256x1xf32>
    tpu.vector_store %arg10[%c0_22, %c0_23], %29 {strides = array<i32>} : memref<256x1xf32, #tpu.memory_space<vmem>>, vector<256x1xf32>,
    return
  }
  func.func @transform_0(%arg0: i32) -> (i32, i32) {
    %c0_i32 = arith.constant 0 : i32
    %c0_i32_0 = arith.constant 0 : i32
    return %arg0, %c0_i32 : i32, i32
  }
  func.func @transform_1(%arg0: i32) -> (i32, i32) {
    %c0_i32 = arith.constant 0 : i32
    %c0_i32_0 = arith.constant 0 : i32
    return %arg0, %c0_i32 : i32, i32
  }
  func.func @transform_2(%arg0: i32) -> (i32, i32) {
    %c0_i32 = arith.constant 0 : i32
    %c0_i32_0 = arith.constant 0 : i32
    %c0_i32_1 = arith.constant 0 : i32
    return %c0_i32, %c0_i32_0 : i32, i32
  }
  func.func @transform_3(%arg0: i32) -> (i32, i32) {
    %c0_i32 = arith.constant 0 : i32
    %c0_i32_0 = arith.constant 0 : i32
    %c0_i32_1 = arith.constant 0 : i32
    return %c0_i32, %c0_i32_0 : i32, i32
  }
  func.func @transform_4(%arg0: i32) -> (i32, i32) {
    %c0_i32 = arith.constant 0 : i32
    %c0_i32_0 = arith.constant 0 : i32
    %c0_i32_1 = arith.constant 0 : i32
    return %c0_i32, %c0_i32_0 : i32, i32
  }
  func.func @transform_5(%arg0: i32) -> (i32, i32) {
    %c0_i32 = arith.constant 0 : i32
    %c0_i32_0 = arith.constant 0 : i32
    %c0_i32_1 = arith.constant 0 : i32
    return %c0_i32, %c0_i32_0 : i32, i32
  }
  func.func @transform_6(%arg0: i32) -> (i32, i32) {
    %c0_i32 = arith.constant 0 : i32
    %c0_i32_0 = arith.constant 0 : i32
    %c0_i32_1 = arith.constant 0 : i32
    return %c0_i32, %c0_i32_0 : i32, i32
  }
  func.func @transform_7(%arg0: i32) -> (i32, i32) {
    %c0_i32 = arith.constant 0 : i32
    %c0_i32_0 = arith.constant 0 : i32
    %c0_i32_1 = arith.constant 0 : i32
    return %c0_i32, %c0_i32_0 : i32, i32
  }
  func.func @transform_8(%arg0: i32) -> (i32, i32) {
    %c0_i32 = arith.constant 0 : i32
    %c0_i32_0 = arith.constant 0 : i32
    %c0_i32_1 = arith.constant 0 : i32
    return %c0_i32, %c0_i32_0 : i32, i32
  }
  func.func @transform_9(%arg0: i32) -> (i32, i32) {
    %c0_i32 = arith.constant 0 : i32
    %c0_i32_0 = arith.constant 0 : i32
    return %arg0, %c0_i32 : i32, i32
  }
}

</mosaic_0001>

<llo_original>
// kernel: tpu_custom_call.1
$region0: #{tpu_custom_call.1}
  #allocation0 [shape = 'u32[]', space=smem, size = 0x4, offset = 0x4, fixed_abs, tag = 'smem constant byte address 0x4 - core index']
  #allocation1 [shape = 'u32[144,128]{1,0:T(1,128)}', space=vmem, size = 0x12000, scoped, tag = 'internal scratch']
  #allocation2 [shape = 'f32[1,1]{1,0:T(1,128)S(1)}', space=vmem, size = 0x200, scoped, tag = 'scoped memory for tpu_custom_call.1']
  %s0 = inlined_call_operand.vmem [shape: f32[256,16], index: 0, kind: input, shape index: {}]
  %s1 = inlined_call_operand.vmem [shape: f32[256,16], index: 1, kind: input, shape index: {}]
  %s2 = inlined_call_operand.vmem [shape: bf16[16,256], index: 2, kind: input, shape index: {}]
  %s3 = inlined_call_operand.vmem [shape: bf16[16,256], index: 3, kind: input, shape index: {}]
  %s4 = inlined_call_operand.vmem [shape: f32[1,256], index: 4, kind: input, shape index: {}]
  %s5 = inlined_call_operand.vmem [shape: bf16[256,256], index: 5, kind: input, shape index: {}]
  %s6 = inlined_call_operand.vmem [shape: f32[1,256], index: 6, kind: input, shape index: {}]
  %s7 = inlined_call_operand.vmem [shape: f32[1,256], index: 7, kind: input, shape index: {}]
  %s8 = inlined_call_operand.<no memory space> [shape: f32[1,1], index: 8, kind: input, shape index: {}]
  %s9 = inlined_call_operand.vmem [shape: f32[256,1], index: 9, kind: output, shape index: {}]
  %s10 = sld [smem:[#allocation0]]
  $region46: #{tpu_custom_call.1} parent=0
    _
  %s12 = ssub.s32 1, %s10
  %s13 = scalar_select 0, %s12, %s10
  %v14 = vstv %s8
  %15 = vst [vmem:[#allocation2] sm:$0x1] %v14
  // Predicated region
  $region2: #{tpu_custom_call.1} parent=0 // pred_check
    _
  $region3: #{tpu_custom_call.1} parent=0 // pred_check_branch
    %17 = sbr.rel (0) target = $region5
  $region4: #{tpu_custom_call.1} parent=0 // pred_region
    _
  $region5: #{tpu_custom_call.1} parent=0 // pred_fallthru
    _
  // Predicated region
  $region6: #{tpu_custom_call.1} parent=0 // pred_check
    _
  $region7: #{tpu_custom_call.1} parent=0 // pred_check_branch
    %19 = sbr.rel (0) target = $region9
  $region8: #{tpu_custom_call.1} parent=0 // pred_region
    _
  $region9: #{tpu_custom_call.1} parent=0 // pred_fallthru
    _
  // Predicated region
  $region10: #{tpu_custom_call.1} parent=0 // pred_check
    _
  $region11: #{tpu_custom_call.1} parent=0 // pred_check_branch
    %21 = sbr.rel (0) target = $region13
  $region12: #{tpu_custom_call.1} parent=0 // pred_region
    _
  $region13: #{tpu_custom_call.1} parent=0 // pred_fallthru
    _
  // Predicated region
  $region14: #{tpu_custom_call.1} parent=0 // pred_check
    _
  $region15: #{tpu_custom_call.1} parent=0 // pred_check_branch
    %23 = sbr.rel (0) target = $region17
  $region16: #{tpu_custom_call.1} parent=0 // pred_region
    _
  $region17: #{tpu_custom_call.1} parent=0 // pred_fallthru
    _
  // Predicated region
  $region18: #{tpu_custom_call.1} parent=0 // pred_check
    _
  $region19: #{tpu_custom_call.1} parent=0 // pred_check_branch
    %25 = sbr.rel (0) target = $region21
  $region20: #{tpu_custom_call.1} parent=0 // pred_region
    _
  $region21: #{tpu_custom_call.1} parent=0 // pred_fallthru
    _
  // Predicated region
  $region22: #{tpu_custom_call.1} parent=0 // pred_check
    _
  $region23: #{tpu_custom_call.1} parent=0 // pred_check_branch
    %27 = sbr.rel (0) target = $region25
  $region24: #{tpu_custom_call.1} parent=0 // pred_region
    _
  $region25: #{tpu_custom_call.1} parent=0 // pred_fallthru
    _
  // Predicated region
  $region26: #{tpu_custom_call.1} parent=0 // pred_check
    _
  $region27: #{tpu_custom_call.1} parent=0 // pred_check_branch
    %29 = sbr.rel (0) target = $region29
  $region28: #{tpu_custom_call.1} parent=0 // pred_region
    _
  $region29: #{tpu_custom_call.1} parent=0 // pred_fallthru
    _
  // Predicated region
  $region30: #{tpu_custom_call.1} parent=0 // pred_check
    _
  $region31: #{tpu_custom_call.1} parent=0 // pred_check_branch
    %31 = sbr.rel (0) target = $region33
  $region32: #{tpu_custom_call.1} parent=0 // pred_region
    _
  $region33: #{tpu_custom_call.1} parent=0 // pred_fallthru
    _
  // Predicated region
  $region34: #{tpu_custom_call.1} parent=0 // pred_check
    _
  $region35: #{tpu_custom_call.1} parent=0 // pred_check_branch
    %33 = sbr.rel (0) target = $region37
  $region36: #{tpu_custom_call.1} parent=0 // pred_region
    _
  $region37: #{tpu_custom_call.1} parent=0 // pred_fallthru
    _
  %v35 = vld [vmem:[%s0] sm:$0xff]
  %v36 = vld [vmem:[%s0 + $0x8] sm:$0xff]
  %v37 = vld [vmem:[%s0 + $0x10] sm:$0xff]
  %v38 = vld [vmem:[%s0 + $0x18] sm:$0xff]
  %v39 = vld [vmem:[%s0 + $0x20] sm:$0xff]
  %v40 = vld [vmem:[%s0 + $0x28] sm:$0xff]
  %v41 = vld [vmem:[%s0 + $0x30] sm:$0xff]
  %v42 = vld [vmem:[%s0 + $0x38] sm:$0xff]
  %v43 = vld [vmem:[%s0 + $0x40] sm:$0xff]
  %v44 = vld [vmem:[%s0 + $0x48] sm:$0xff]
  %v45 = vld [vmem:[%s0 + $0x50] sm:$0xff]
  %v46 = vld [vmem:[%s0 + $0x58] sm:$0xff]
  %v47 = vld [vmem:[%s0 + $0x60] sm:$0xff]
  %v48 = vld [vmem:[%s0 + $0x68] sm:$0xff]
  %v49 = vld [vmem:[%s0 + $0x70] sm:$0xff]
  %v50 = vld [vmem:[%s0 + $0x78] sm:$0xff]
  %v51 = vld [vmem:[%s0 + $0x80] sm:$0xff]
  %v52 = vld [vmem:[%s0 + $0x88] sm:$0xff]
  %v53 = vld [vmem:[%s0 + $0x90] sm:$0xff]
  %v54 = vld [vmem:[%s0 + $0x98] sm:$0xff]
  %v55 = vld [vmem:[%s0 + $0xa0] sm:$0xff]
  %v56 = vld [vmem:[%s0 + $0xa8] sm:$0xff]
  %v57 = vld [vmem:[%s0 + $0xb0] sm:$0xff]
  %v58 = vld [vmem:[%s0 + $0xb8] sm:$0xff]
  %v59 = vld [vmem:[%s0 + $0xc0] sm:$0xff]
  %v60 = vld [vmem:[%s0 + $0xc8] sm:$0xff]
  %v61 = vld [vmem:[%s0 + $0xd0] sm:$0xff]
  %v62 = vld [vmem:[%s0 + $0xd8] sm:$0xff]
  %v63 = vld [vmem:[%s0 + $0xe0] sm:$0xff]
  %v64 = vld [vmem:[%s0 + $0xe8] sm:$0xff]
  %v65 = vld [vmem:[%s0 + $0xf0] sm:$0xff]
  %v66 = vld [vmem:[%s0 + $0xf8] sm:$0xff]
  %v67 = vpack.c.bf16 %v36, %v35
  %v68 = vpack.c.bf16 %v38, %v37
  %v69 = vpack.c.bf16 %v40, %v39
  %v70 = vpack.c.bf16 %v42, %v41
  %v71 = vpack.c.bf16 %v44, %v43
  %v72 = vpack.c.bf16 %v46, %v45
  %v73 = vpack.c.bf16 %v48, %v47
  %v74 = vpack.c.bf16 %v50, %v49
  %v75 = vpack.c.bf16 %v52, %v51
  %v76 = vpack.c.bf16 %v54, %v53
  %v77 = vpack.c.bf16 %v56, %v55
  %v78 = vpack.c.bf16 %v58, %v57
  %v79 = vpack.c.bf16 %v60, %v59
  %v80 = vpack.c.bf16 %v62, %v61
  %v81 = vpack.c.bf16 %v64, %v63
  %v82 = vpack.c.bf16 %v66, %v65
  %v83 = vld [vmem:[%s1] sm:$0xff]
  %v84 = vld [vmem:[%s1 + $0x8] sm:$0xff]
  %v85 = vld [vmem:[%s1 + $0x10] sm:$0xff]
  %v86 = vld [vmem:[%s1 + $0x18] sm:$0xff]
  %v87 = vld [vmem:[%s1 + $0x20] sm:$0xff]
  %v88 = vld [vmem:[%s1 + $0x28] sm:$0xff]
  %v89 = vld [vmem:[%s1 + $0x30] sm:$0xff]
  %v90 = vld [vmem:[%s1 + $0x38] sm:$0xff]
  %v91 = vld [vmem:[%s1 + $0x40] sm:$0xff]
  %v92 = vld [vmem:[%s1 + $0x48] sm:$0xff]
  %v93 = vld [vmem:[%s1 + $0x50] sm:$0xff]
  %v94 = vld [vmem:[%s1 + $0x58] sm:$0xff]
  %v95 = vld [vmem:[%s1 + $0x60] sm:$0xff]
  %v96 = vld [vmem:[%s1 + $0x68] sm:$0xff]
  %v97 = vld [vmem:[%s1 + $0x70] sm:$0xff]
  %v98 = vld [vmem:[%s1 + $0x78] sm:$0xff]
  %v99 = vld [vmem:[%s1 + $0x80] sm:$0xff]
  %v100 = vld [vmem:[%s1 + $0x88] sm:$0xff]
  %v101 = vld [vmem:[%s1 + $0x90] sm:$0xff]
  %v102 = vld [vmem:[%s1 + $0x98] sm:$0xff]
  %v103 = vld [vmem:[%s1 + $0xa0] sm:$0xff]
  %v104 = vld [vmem:[%s1 + $0xa8] sm:$0xff]
  %v105 = vld [vmem:[%s1 + $0xb0] sm:$0xff]
  %v106 = vld [vmem:[%s1 + $0xb8] sm:$0xff]
  %v107 = vld [vmem:[%s1 + $0xc0] sm:$0xff]
  %v108 = vld [vmem:[%s1 + $0xc8] sm:$0xff]
  %v109 = vld [vmem:[%s1 + $0xd0] sm:$0xff]
  %v110 = vld [vmem:[%s1 + $0xd8] sm:$0xff]
  %v111 = vld [vmem:[%s1 + $0xe0] sm:$0xff]
  %v112 = vld [vmem:[%s1 + $0xe8] sm:$0xff]
  %v113 = vld [vmem:[%s1 + $0xf0] sm:$0xff]
  %v114 = vld [vmem:[%s1 + $0xf8] sm:$0xff]
  %v115 = vpack.c.bf16 %v84, %v83
  %v116 = vpack.c.bf16 %v86, %v85
  %v117 = vpack.c.bf16 %v88, %v87
  %v118 = vpack.c.bf16 %v90, %v89
  %v119 = vpack.c.bf16 %v92, %v91
  %v120 = vpack.c.bf16 %v94, %v93
  %v121 = vpack.c.bf16 %v96, %v95
  %v122 = vpack.c.bf16 %v98, %v97
  %v123 = vpack.c.bf16 %v100, %v99
  %v124 = vpack.c.bf16 %v102, %v101
  %v125 = vpack.c.bf16 %v104, %v103
  %v126 = vpack.c.bf16 %v106, %v105
  %v127 = vpack.c.bf16 %v108, %v107
  %v128 = vpack.c.bf16 %v110, %v109
  %v129 = vpack.c.bf16 %v112, %v111
  %v130 = vpack.c.bf16 %v114, %v113
  %v131 = vld [vmem:[%s2] sm:$0xff]
  %v132 = vld [vmem:[%s2 + $0x8] sm:$0xff]
  %v133 = vld [vmem:[%s3] sm:$0xff]
  %v134 = vld [vmem:[%s3 + $0x8] sm:$0xff]
  %v137 = vunpack.c.l.b16 %v133
  %v138 = vunpack.c.h.b16 %v133
  %v139 = vunpack.c.l.b16 %v134
  %v140 = vunpack.c.h.b16 %v134
  %v141 = vpack.c.b16 %v139, %v137
  %v142 = vpack.c.b16 %v140, %v138
  %vm145 = vcmask 130048
  %v147 = vsel %vm145, %v115, 0
  %v150 = vsel %vm145, %v116, 0
  %v153 = vsel %vm145, %v117, 0
  %v156 = vsel %vm145, %v118, 0
  %v159 = vsel %vm145, %v119, 0
  %v162 = vsel %vm145, %v120, 0
  %v165 = vsel %vm145, %v121, 0
  %v168 = vsel %vm145, %v122, 0
  %v171 = vsel %vm145, %v123, 0
  %v174 = vsel %vm145, %v124, 0
  %v177 = vsel %vm145, %v125, 0
  %v180 = vsel %vm145, %v126, 0
  %v183 = vsel %vm145, %v127, 0
  %v186 = vsel %vm145, %v128, 0
  %v189 = vsel %vm145, %v129, 0
  %v192 = vsel %vm145, %v130, 0
  %194 = vmatprep.subr.bf16.mxu0 0
  %195 = vmatpush1.bf16.msra.mxu0 0
  %196 = vmatprep.subr.bf16.mxu0 0
  %197 = vmatpush1.bf16.msra.mxu0 0
  %198 = vmatprep.subr.bf16.mxu0 0
  %199 = vmatpush1.bf16.msra.mxu0 0
  %200 = vmatprep.subr.bf16.mxu0 0
  %201 = vmatpush1.bf16.msra.mxu0 0
  %202 = vmatprep.subr.bf16.mxu0 0
  %203 = vmatpush1.bf16.msra.mxu0 0
  %204 = vmatprep.subr.bf16.mxu0 0
  %205 = vmatpush1.bf16.msra.mxu0 0
  %206 = vmatprep.subr.bf16.mxu0 0
  %207 = vmatpush1.bf16.msra.mxu0 0
  %208 = vmatprep.subr.bf16.mxu0 %v142
  %209 = vmatpush1.bf16.msra.mxu0 %v141
  %210 = vmatprep.subr.bf16.mxu0 0
  %211 = vmatpush2.bf16.msra.mxu0 0
  %212 = vmatprep.subr.bf16.mxu0 0
  %213 = vmatpush2.bf16.msra.mxu0 0
  %214 = vmatprep.subr.bf16.mxu0 0
  %215 = vmatpush2.bf16.msra.mxu0 0
  %216 = vmatprep.subr.bf16.mxu0 0
  %217 = vmatpush2.bf16.msra.mxu0 0
  %218 = vmatprep.subr.bf16.mxu0 0
  %219 = vmatpush2.bf16.msra.mxu0 0
  %220 = vmatprep.subr.bf16.mxu0 0
  %221 = vmatpush2.bf16.msra.mxu0 0
  %222 = vmatprep.subr.bf16.mxu0 0
  %223 = vmatpush2.bf16.msra.mxu0 0
  %224 = vmatprep.subr.bf16.mxu0 0
  %225 = vmatpush2.bf16.msra.mxu0 0
  %226 = vmatprep.mubr.bf16.mxu0 0
  %227 = vmatmul.mubr.bf16.gmra.mxu0 %v147
  %v228 = vpop.f32.mrf.mxu0
  %v229 = vadd.f32 0.0, %v228
  %v230 = vpop.f32.mrf.mxu0
  %v231 = vadd.f32 0.0, %v230
  %v232 = vpop.f32.mrf.mxu0
  %v233 = vadd.f32 0.0, %v232
  %v234 = vpop.f32.mrf.mxu0
  %v235 = vadd.f32 0.0, %v234
  %236 = vmatprep.mubr.bf16.mxu0 0
  %237 = vmatmul.mubr.bf16.gmra.mxu0 %v150
  %v238 = vpop.f32.mrf.mxu0
  %v239 = vadd.f32 0.0, %v238
  %v240 = vpop.f32.mrf.mxu0
  %v241 = vadd.f32 0.0, %v240
  %v242 = vpop.f32.mrf.mxu0
  %v243 = vadd.f32 0.0, %v242
  %v244 = vpop.f32.mrf.mxu0
  %v245 = vadd.f32 0.0, %v244
  %246 = vmatprep.mubr.bf16.mxu0 0
  %247 = vmatmul.mubr.bf16.gmra.mxu0 %v153
  %v248 = vpop.f32.mrf.mxu0
  %v249 = vadd.f32 0.0, %v248
  %v250 = vpop.f32.mrf.mxu0
  %v251 = vadd.f32 0.0, %v250
  %v252 = vpop.f32.mrf.mxu0
  %v253 = vadd.f32 0.0, %v252
  %v254 = vpop.f32.mrf.mxu0
  %v255 = vadd.f32 0.0, %v254
  %256 = vmatprep.mubr.bf16.mxu0 0
  %257 = vmatmul.mubr.bf16.gmra.mxu0 %v156
  %v258 = vpop.f32.mrf.mxu0
  %v259 = vadd.f32 0.0, %v258
  %v260 = vpop.f32.mrf.mxu0
  %v261 = vadd.f32 0.0, %v260
  %v262 = vpop.f32.mrf.mxu0
  %v263 = vadd.f32 0.0, %v262
  %v264 = vpop.f32.mrf.mxu0
  %v265 = vadd.f32 0.0, %v264
  %266 = vmatprep.mubr.bf16.mxu0 0
  %267 = vmatmul.mubr.bf16.gmra.mxu0 %v159
  %v268 = vpop.f32.mrf.mxu0
  %v269 = vadd.f32 0.0, %v268
  %v270 = vpop.f32.mrf.mxu0
  %v271 = vadd.f32 0.0, %v270
  %v272 = vpop.f32.mrf.mxu0
  %v273 = vadd.f32 0.0, %v272
  %v274 = vpop.f32.mrf.mxu0
  %v275 = vadd.f32 0.0, %v274
  %276 = vmatprep.mubr.bf16.mxu0 0
  %277 = vmatmul.mubr.bf16.gmra.mxu0 %v162
  %v278 = vpop.f32.mrf.mxu0
  %v279 = vadd.f32 0.0, %v278
  %v280 = vpop.f32.mrf.mxu0
  %v281 = vadd.f32 0.0, %v280
  %v282 = vpop.f32.mrf.mxu0
  %v283 = vadd.f32 0.0, %v282
  %v284 = vpop.f32.mrf.mxu0
  %v285 = vadd.f32 0.0, %v284
  %286 = vmatprep.mubr.bf16.mxu0 0
  %287 = vmatmul.mubr.bf16.gmra.mxu0 %v165
  %v288 = vpop.f32.mrf.mxu0
  %v289 = vadd.f32 0.0, %v288
  %v290 = vpop.f32.mrf.mxu0
  %v291 = vadd.f32 0.0, %v290
  %v292 = vpop.f32.mrf.mxu0
  %v293 = vadd.f32 0.0, %v292
  %v294 = vpop.f32.mrf.mxu0
  %v295 = vadd.f32 0.0, %v294
  %296 = vmatprep.mubr.bf16.mxu0 0
  %297 = vmatmul.mubr.bf16.gmra.mxu0 %v168
  %v298 = vpop.f32.mrf.mxu0
  %v299 = vadd.f32 0.0, %v298
  %v300 = vpop.f32.mrf.mxu0
  %v301 = vadd.f32 0.0, %v300
  %v302 = vpop.f32.mrf.mxu0
  %v303 = vadd.f32 0.0, %v302
  %v304 = vpop.f32.mrf.mxu0
  %v305 = vadd.f32 0.0, %v304
  %306 = vmatprep.mubr.bf16.mxu0 0
  %307 = vmatmul.mubr.bf16.gmra.mxu0 %v171
  %v308 = vpop.f32.mrf.mxu0
  %v309 = vadd.f32 0.0, %v308
  %v310 = vpop.f32.mrf.mxu0
  %v311 = vadd.f32 0.0, %v310
  %v312 = vpop.f32.mrf.mxu0
  %v313 = vadd.f32 0.0, %v312
  %v314 = vpop.f32.mrf.mxu0
  %v315 = vadd.f32 0.0, %v314
  %316 = vmatprep.mubr.bf16.mxu0 0
  %317 = vmatmul.mubr.bf16.gmra.mxu0 %v174
  %v318 = vpop.f32.mrf.mxu0
  %v319 = vadd.f32 0.0, %v318
  %v320 = vpop.f32.mrf.mxu0
  %v321 = vadd.f32 0.0, %v320
  %v322 = vpop.f32.mrf.mxu0
  %v323 = vadd.f32 0.0, %v322
  %v324 = vpop.f32.mrf.mxu0
  %v325 = vadd.f32 0.0, %v324
  %326 = vmatprep.mubr.bf16.mxu0 0
  %327 = vmatmul.mubr.bf16.gmra.mxu0 %v177
  %v328 = vpop.f32.mrf.mxu0
  %v329 = vadd.f32 0.0, %v328
  %v330 = vpop.f32.mrf.mxu0
  %v331 = vadd.f32 0.0, %v330
  %v332 = vpop.f32.mrf.mxu0
  %v333 = vadd.f32 0.0, %v332
  %v334 = vpop.f32.mrf.mxu0
  %v335 = vadd.f32 0.0, %v334
  %336 = vmatprep.mubr.bf16.mxu0 0
  %337 = vmatmul.mubr.bf16.gmra.mxu0 %v180
  %v338 = vpop.f32.mrf.mxu0
  %v339 = vadd.f32 0.0, %v338
  %v340 = vpop.f32.mrf.mxu0
  %v341 = vadd.f32 0.0, %v340
  %v342 = vpop.f32.mrf.mxu0
  %v343 = vadd.f32 0.0, %v342
  %v344 = vpop.f32.mrf.mxu0
  %v345 = vadd.f32 0.0, %v344
  %346 = vmatprep.mubr.bf16.mxu0 0
  %347 = vmatmul.mubr.bf16.gmra.mxu0 %v183
  %v348 = vpop.f32.mrf.mxu0
  %v349 = vadd.f32 0.0, %v348
  %v350 = vpop.f32.mrf.mxu0
  %v351 = vadd.f32 0.0, %v350
  %v352 = vpop.f32.mrf.mxu0
  %v353 = vadd.f32 0.0, %v352
  %v354 = vpop.f32.mrf.mxu0
  %v355 = vadd.f32 0.0, %v354
  %356 = vmatprep.mubr.bf16.mxu0 0
  %357 = vmatmul.mubr.bf16.gmra.mxu0 %v186
  %v358 = vpop.f32.mrf.mxu0
  %v359 = vadd.f32 0.0, %v358
  %v360 = vpop.f32.mrf.mxu0
  %v361 = vadd.f32 0.0, %v360
  %v362 = vpop.f32.mrf.mxu0
  %v363 = vadd.f32 0.0, %v362
  %v364 = vpop.f32.mrf.mxu0
  %v365 = vadd.f32 0.0, %v364
  %366 = vmatprep.mubr.bf16.mxu0 0
  %367 = vmatmul.mubr.bf16.gmra.mxu0 %v189
  %v368 = vpop.f32.mrf.mxu0
  %v369 = vadd.f32 0.0, %v368
  %v370 = vpop.f32.mrf.mxu0
  %v371 = vadd.f32 0.0, %v370
  %v372 = vpop.f32.mrf.mxu0
  %v373 = vadd.f32 0.0, %v372
  %v374 = vpop.f32.mrf.mxu0
  %v375 = vadd.f32 0.0, %v374
  %376 = vmatprep.mubr.bf16.mxu0 0
  %377 = vmatmul.mubr.bf16.gmra.mxu0 %v192
  %v378 = vpop.f32.mrf.mxu0
  %v379 = vadd.f32 0.0, %v378
  %v380 = vpop.f32.mrf.mxu0
  %v381 = vadd.f32 0.0, %v380
  %v382 = vpop.f32.mrf.mxu0
  %v383 = vadd.f32 0.0, %v382
  %v384 = vpop.f32.mrf.mxu0
  %v385 = vadd.f32 0.0, %v384
  %386 = vdwg.mxu0
  %v389 = vunpack.c.l.b16 %v131
  %v390 = vunpack.c.h.b16 %v131
  %v391 = vunpack.c.l.b16 %v132
  %v392 = vunpack.c.h.b16 %v132
  %v393 = vpack.c.b16 %v391, %v389
  %v394 = vpack.c.b16 %v392, %v390
  %v398 = vsel %vm145, %v67, 0
  %v401 = vsel %vm145, %v68, 0
  %v404 = vsel %vm145, %v69, 0
  %v407 = vsel %vm145, %v70, 0
  %v410 = vsel %vm145, %v71, 0
  %v413 = vsel %vm145, %v72, 0
  %v416 = vsel %vm145, %v73, 0
  %v419 = vsel %vm145, %v74, 0
  %v422 = vsel %vm145, %v75, 0
  %v425 = vsel %vm145, %v76, 0
  %v428 = vsel %vm145, %v77, 0
  %v431 = vsel %vm145, %v78, 0
  %v434 = vsel %vm145, %v79, 0
  %v437 = vsel %vm145, %v80, 0
  %v440 = vsel %vm145, %v81, 0
  %v443 = vsel %vm145, %v82, 0
  %445 = vmatprep.subr.bf16.mxu0 0
  %446 = vmatpush1.bf16.msra.mxu0 0
  %447 = vmatprep.subr.bf16.mxu0 0
  %448 = vmatpush1.bf16.msra.mxu0 0
  %449 = vmatprep.subr.bf16.mxu0 0
  %450 = vmatpush1.bf16.msra.mxu0 0
  %451 = vmatprep.subr.bf16.mxu0 0
  %452 = vmatpush1.bf16.msra.mxu0 0
  %453 = vmatprep.subr.bf16.mxu0 0
  %454 = vmatpush1.bf16.msra.mxu0 0
  %455 = vmatprep.subr.bf16.mxu0 0
  %456 = vmatpush1.bf16.msra.mxu0 0
  %457 = vmatprep.subr.bf16.mxu0 0
  %458 = vmatpush1.bf16.msra.mxu0 0
  %459 = vmatprep.subr.bf16.mxu0 %v394
  %460 = vmatpush1.bf16.msra.mxu0 %v393
  %461 = vmatprep.subr.bf16.mxu0 0
  %462 = vmatpush2.bf16.msra.mxu0 0
  %463 = vmatprep.subr.bf16.mxu0 0
  %464 = vmatpush2.bf16.msra.mxu0 0
  %465 = vmatprep.subr.bf16.mxu0 0
  %466 = vmatpush2.bf16.msra.mxu0 0
  %467 = vmatprep.subr.bf16.mxu0 0
  %468 = vmatpush2.bf16.msra.mxu0 0
  %469 = vmatprep.subr.bf16.mxu0 0
  %470 = vmatpush2.bf16.msra.mxu0 0
  %471 = vmatprep.subr.bf16.mxu0 0
  %472 = vmatpush2.bf16.msra.mxu0 0
  %473 = vmatprep.subr.bf16.mxu0 0
  %474 = vmatpush2.bf16.msra.mxu0 0
  %475 = vmatprep.subr.bf16.mxu0 0
  %476 = vmatpush2.bf16.msra.mxu0 0
  %477 = vmatprep.mubr.bf16.mxu0 0
  %478 = vmatmul.mubr.bf16.gmra.mxu0 %v398
  %v479 = vpop.f32.mrf.mxu0
  %v480 = vadd.f32 %v229, %v479
  %v481 = vpop.f32.mrf.mxu0
  %v482 = vadd.f32 %v231, %v481
  %v483 = vpop.f32.mrf.mxu0
  %v484 = vadd.f32 %v233, %v483
  %v485 = vpop.f32.mrf.mxu0
  %v486 = vadd.f32 %v235, %v485
  %487 = vmatprep.mubr.bf16.mxu0 0
  %488 = vmatmul.mubr.bf16.gmra.mxu0 %v401
  %v489 = vpop.f32.mrf.mxu0
  %v490 = vadd.f32 %v239, %v489
  %v491 = vpop.f32.mrf.mxu0
  %v492 = vadd.f32 %v241, %v491
  %v493 = vpop.f32.mrf.mxu0
  %v494 = vadd.f32 %v243, %v493
  %v495 = vpop.f32.mrf.mxu0
  %v496 = vadd.f32 %v245, %v495
  %497 = vmatprep.mubr.bf16.mxu0 0
  %498 = vmatmul.mubr.bf16.gmra.mxu0 %v404
  %v499 = vpop.f32.mrf.mxu0
  %v500 = vadd.f32 %v249, %v499
  %v501 = vpop.f32.mrf.mxu0
  %v502 = vadd.f32 %v251, %v501
  %v503 = vpop.f32.mrf.mxu0
  %v504 = vadd.f32 %v253, %v503
  %v505 = vpop.f32.mrf.mxu0
  %v506 = vadd.f32 %v255, %v505
  %507 = vmatprep.mubr.bf16.mxu0 0
  %508 = vmatmul.mubr.bf16.gmra.mxu0 %v407
  %v509 = vpop.f32.mrf.mxu0
  %v510 = vadd.f32 %v259, %v509
  %v511 = vpop.f32.mrf.mxu0
  %v512 = vadd.f32 %v261, %v511
  %v513 = vpop.f32.mrf.mxu0
  %v514 = vadd.f32 %v263, %v513
  %v515 = vpop.f32.mrf.mxu0
  %v516 = vadd.f32 %v265, %v515
  %517 = vmatprep.mubr.bf16.mxu0 0
  %518 = vmatmul.mubr.bf16.gmra.mxu0 %v410
  %v519 = vpop.f32.mrf.mxu0
  %v520 = vadd.f32 %v269, %v519
  %v521 = vpop.f32.mrf.mxu0
  %v522 = vadd.f32 %v271, %v521
  %v523 = vpop.f32.mrf.mxu0
  %v524 = vadd.f32 %v273, %v523
  %v525 = vpop.f32.mrf.mxu0
  %v526 = vadd.f32 %v275, %v525
  %527 = vmatprep.mubr.bf16.mxu0 0
  %528 = vmatmul.mubr.bf16.gmra.mxu0 %v413
  %v529 = vpop.f32.mrf.mxu0
  %v530 = vadd.f32 %v279, %v529
  %v531 = vpop.f32.mrf.mxu0
  %v532 = vadd.f32 %v281, %v531
  %v533 = vpop.f32.mrf.mxu0
  %v534 = vadd.f32 %v283, %v533
  %v535 = vpop.f32.mrf.mxu0
  %v536 = vadd.f32 %v285, %v535
  %537 = vmatprep.mubr.bf16.mxu0 0
  %538 = vmatmul.mubr.bf16.gmra.mxu0 %v416
  %v539 = vpop.f32.mrf.mxu0
  %v540 = vadd.f32 %v289, %v539
  %v541 = vpop.f32.mrf.mxu0
  %v542 = vadd.f32 %v291, %v541
  %v543 = vpop.f32.mrf.mxu0
  %v544 = vadd.f32 %v293, %v543
  %v545 = vpop.f32.mrf.mxu0
  %v546 = vadd.f32 %v295, %v545
  %547 = vmatprep.mubr.bf16.mxu0 0
  %548 = vmatmul.mubr.bf16.gmra.mxu0 %v419
  %v549 = vpop.f32.mrf.mxu0
  %v550 = vadd.f32 %v299, %v549
  %v551 = vpop.f32.mrf.mxu0
  %v552 = vadd.f32 %v301, %v551
  %v553 = vpop.f32.mrf.mxu0
  %v554 = vadd.f32 %v303, %v553
  %v555 = vpop.f32.mrf.mxu0
  %v556 = vadd.f32 %v305, %v555
  %557 = vmatprep.mubr.bf16.mxu0 0
  %558 = vmatmul.mubr.bf16.gmra.mxu0 %v422
  %v559 = vpop.f32.mrf.mxu0
  %v560 = vadd.f32 %v309, %v559
  %v561 = vpop.f32.mrf.mxu0
  %v562 = vadd.f32 %v311, %v561
  %v563 = vpop.f32.mrf.mxu0
  %v564 = vadd.f32 %v313, %v563
  %v565 = vpop.f32.mrf.mxu0
  %v566 = vadd.f32 %v315, %v565
  %567 = vmatprep.mubr.bf16.mxu0 0
  %568 = vmatmul.mubr.bf16.gmra.mxu0 %v425
  %v569 = vpop.f32.mrf.mxu0
  %v570 = vadd.f32 %v319, %v569
  %v571 = vpop.f32.mrf.mxu0
  %v572 = vadd.f32 %v321, %v571
  %v573 = vpop.f32.mrf.mxu0
  %v574 = vadd.f32 %v323, %v573
  %v575 = vpop.f32.mrf.mxu0
  %v576 = vadd.f32 %v325, %v575
  %577 = vmatprep.mubr.bf16.mxu0 0
  %578 = vmatmul.mubr.bf16.gmra.mxu0 %v428
  %v579 = vpop.f32.mrf.mxu0
  %v580 = vadd.f32 %v329, %v579
  %v581 = vpop.f32.mrf.mxu0
  %v582 = vadd.f32 %v331, %v581
  %v583 = vpop.f32.mrf.mxu0
  %v584 = vadd.f32 %v333, %v583
  %v585 = vpop.f32.mrf.mxu0
  %v586 = vadd.f32 %v335, %v585
  %587 = vmatprep.mubr.bf16.mxu0 0
  %588 = vmatmul.mubr.bf16.gmra.mxu0 %v431
  %v589 = vpop.f32.mrf.mxu0
  %v590 = vadd.f32 %v339, %v589
  %v591 = vpop.f32.mrf.mxu0
  %v592 = vadd.f32 %v341, %v591
  %v593 = vpop.f32.mrf.mxu0
  %v594 = vadd.f32 %v343, %v593
  %v595 = vpop.f32.mrf.mxu0
  %v596 = vadd.f32 %v345, %v595
  %597 = vmatprep.mubr.bf16.mxu0 0
  %598 = vmatmul.mubr.bf16.gmra.mxu0 %v434
  %v599 = vpop.f32.mrf.mxu0
  %v600 = vadd.f32 %v349, %v599
  %v601 = vpop.f32.mrf.mxu0
  %v602 = vadd.f32 %v351, %v601
  %v603 = vpop.f32.mrf.mxu0
  %v604 = vadd.f32 %v353, %v603
  %v605 = vpop.f32.mrf.mxu0
  %v606 = vadd.f32 %v355, %v605
  %607 = vmatprep.mubr.bf16.mxu0 0
  %608 = vmatmul.mubr.bf16.gmra.mxu0 %v437
  %v609 = vpop.f32.mrf.mxu0
  %v610 = vadd.f32 %v359, %v609
  %v611 = vpop.f32.mrf.mxu0
  %v612 = vadd.f32 %v361, %v611
  %v613 = vpop.f32.mrf.mxu0
  %v614 = vadd.f32 %v363, %v613
  %v615 = vpop.f32.mrf.mxu0
  %v616 = vadd.f32 %v365, %v615
  %617 = vmatprep.mubr.bf16.mxu0 0
  %618 = vmatmul.mubr.bf16.gmra.mxu0 %v440
  %v619 = vpop.f32.mrf.mxu0
  %v620 = vadd.f32 %v369, %v619
  %v621 = vpop.f32.mrf.mxu0
  %v622 = vadd.f32 %v371, %v621
  %v623 = vpop.f32.mrf.mxu0
  %v624 = vadd.f32 %v373, %v623
  %v625 = vpop.f32.mrf.mxu0
  %v626 = vadd.f32 %v375, %v625
  %627 = vmatprep.mubr.bf16.mxu0 0
  %628 = vmatmul.mubr.bf16.gmra.mxu0 %v443
  %v629 = vpop.f32.mrf.mxu0
  %v630 = vadd.f32 %v379, %v629
  %v631 = vpop.f32.mrf.mxu0
  %v632 = vadd.f32 %v381, %v631
  %v633 = vpop.f32.mrf.mxu0
  %v634 = vadd.f32 %v383, %v633
  %v635 = vpop.f32.mrf.mxu0
  %v636 = vadd.f32 %v385, %v635
  %637 = vdwg.mxu0
  %v638 = vld [vmem:[%s4] sm:$0x3]
  %v640 = vlaneseq
  %v641 = vshrl.u32 %v640, 7
  %v642 = vsub.s32 0, %v641
  %v643 = vrot.slane %v638, %v642
  %v644 = vlaneseq
  %v645 = vshrl.u32 %v644, 7
  %v646 = vsub.s32 1, %v645
  %v647 = vrot.slane %v638, %v646
  %v650 = vadd.f32 %v480, %v643
  %v651 = vadd.f32 %v482, %v647
  %v652 = vadd.f32 %v484, %v643
  %v653 = vadd.f32 %v486, %v647
  %v654 = vadd.f32 %v490, %v643
  %v655 = vadd.f32 %v492, %v647
  %v656 = vadd.f32 %v494, %v643
  %v657 = vadd.f32 %v496, %v647
  %v658 = vadd.f32 %v500, %v643
  %v659 = vadd.f32 %v502, %v647
  %v660 = vadd.f32 %v504, %v643
  %v661 = vadd.f32 %v506, %v647
  %v662 = vadd.f32 %v510, %v643
  %v663 = vadd.f32 %v512, %v647
  %v664 = vadd.f32 %v514, %v643
  %v665 = vadd.f32 %v516, %v647
  %v666 = vadd.f32 %v520, %v643
  %v667 = vadd.f32 %v522, %v647
  %v668 = vadd.f32 %v524, %v643
  %v669 = vadd.f32 %v526, %v647
  %v670 = vadd.f32 %v530, %v643
  %v671 = vadd.f32 %v532, %v647
  %v672 = vadd.f32 %v534, %v643
  %v673 = vadd.f32 %v536, %v647
  %v674 = vadd.f32 %v540, %v643
  %v675 = vadd.f32 %v542, %v647
  %v676 = vadd.f32 %v544, %v643
  %v677 = vadd.f32 %v546, %v647
  %v678 = vadd.f32 %v550, %v643
  %v679 = vadd.f32 %v552, %v647
  %v680 = vadd.f32 %v554, %v643
  %v681 = vadd.f32 %v556, %v647
  %v682 = vadd.f32 %v560, %v643
  %v683 = vadd.f32 %v562, %v647
  %v684 = vadd.f32 %v564, %v643
  %v685 = vadd.f32 %v566, %v647
  %v686 = vadd.f32 %v570, %v643
  %v687 = vadd.f32 %v572, %v647
  %v688 = vadd.f32 %v574, %v643
  %v689 = vadd.f32 %v576, %v647
  %v690 = vadd.f32 %v580, %v643
  %v691 = vadd.f32 %v582, %v647
  %v692 = vadd.f32 %v584, %v643
  %v693 = vadd.f32 %v586, %v647
  %v694 = vadd.f32 %v590, %v643
  %v695 = vadd.f32 %v592, %v647
  %v696 = vadd.f32 %v594, %v643
  %v697 = vadd.f32 %v596, %v647
  %v698 = vadd.f32 %v600, %v643
  %v699 = vadd.f32 %v602, %v647
  %v700 = vadd.f32 %v604, %v643
  %v701 = vadd.f32 %v606, %v647
  %v702 = vadd.f32 %v610, %v643
  %v703 = vadd.f32 %v612, %v647
  %v704 = vadd.f32 %v614, %v643
  %v705 = vadd.f32 %v616, %v647
  %v706 = vadd.f32 %v620, %v643
  %v707 = vadd.f32 %v622, %v647
  %v708 = vadd.f32 %v624, %v643
  %v709 = vadd.f32 %v626, %v647
  %v710 = vadd.f32 %v630, %v643
  %v711 = vadd.f32 %v632, %v647
  %v712 = vadd.f32 %v634, %v643
  %v713 = vadd.f32 %v636, %v647
  %v714 = vmax.f32 %v650, 0.0
  %v715 = vmax.f32 %v651, 0.0
  %v716 = vmax.f32 %v652, 0.0
  %v717 = vmax.f32 %v653, 0.0
  %v718 = vmax.f32 %v654, 0.0
  %v719 = vmax.f32 %v655, 0.0
  %v720 = vmax.f32 %v656, 0.0
  %v721 = vmax.f32 %v657, 0.0
  %v722 = vmax.f32 %v658, 0.0
  %v723 = vmax.f32 %v659, 0.0
  %v724 = vmax.f32 %v660, 0.0
  %v725 = vmax.f32 %v661, 0.0
  %v726 = vmax.f32 %v662, 0.0
  %v727 = vmax.f32 %v663, 0.0
  %v728 = vmax.f32 %v664, 0.0
  %v729 = vmax.f32 %v665, 0.0
  %v730 = vmax.f32 %v666, 0.0
  %v731 = vmax.f32 %v667, 0.0
  %v732 = vmax.f32 %v668, 0.0
  %v733 = vmax.f32 %v669, 0.0
  %v734 = vmax.f32 %v670, 0.0
  %v735 = vmax.f32 %v671, 0.0
  %v736 = vmax.f32 %v672, 0.0
  %v737 = vmax.f32 %v673, 0.0
  %v738 = vmax.f32 %v674, 0.0
  %v739 = vmax.f32 %v675, 0.0
  %v740 = vmax.f32 %v676, 0.0
  %v741 = vmax.f32 %v677, 0.0
  %v742 = vmax.f32 %v678, 0.0
  %v743 = vmax.f32 %v679, 0.0
  %v744 = vmax.f32 %v680, 0.0
  %v745 = vmax.f32 %v681, 0.0
  %v746 = vmax.f32 %v682, 0.0
  %v747 = vmax.f32 %v683, 0.0
  %v748 = vmax.f32 %v684, 0.0
  %v749 = vmax.f32 %v685, 0.0
  %v750 = vmax.f32 %v686, 0.0
  %v751 = vmax.f32 %v687, 0.0
  %v752 = vmax.f32 %v688, 0.0
  %v753 = vmax.f32 %v689, 0.0
  %v754 = vmax.f32 %v690, 0.0
  %v755 = vmax.f32 %v691, 0.0
  %v756 = vmax.f32 %v692, 0.0
  %v757 = vmax.f32 %v693, 0.0
  %v758 = vmax.f32 %v694, 0.0
  %v759 = vmax.f32 %v695, 0.0
  %v760 = vmax.f32 %v696, 0.0
  %v761 = vmax.f32 %v697, 0.0
  %v762 = vmax.f32 %v698, 0.0
  %v763 = vmax.f32 %v699, 0.0
  %v764 = vmax.f32 %v700, 0.0
  %v765 = vmax.f32 %v701, 0.0
  %v766 = vmax.f32 %v702, 0.0
  %v767 = vmax.f32 %v703, 0.0
  %v768 = vmax.f32 %v704, 0.0
  %v769 = vmax.f32 %v705, 0.0
  %v770 = vmax.f32 %v706, 0.0
  %v771 = vmax.f32 %v707, 0.0
  %v772 = vmax.f32 %v708, 0.0
  %v773 = vmax.f32 %v709, 0.0
  %v774 = vmax.f32 %v710, 0.0
  %v775 = vmax.f32 %v711, 0.0
  %v776 = vmax.f32 %v712, 0.0
  %v777 = vmax.f32 %v713, 0.0
  %v778 = vpack.c.bf16 %v716, %v714
  %v779 = vpack.c.bf16 %v717, %v715
  %v780 = vpack.c.bf16 %v720, %v718
  %v781 = vpack.c.bf16 %v721, %v719
  %v782 = vpack.c.bf16 %v724, %v722
  %v783 = vpack.c.bf16 %v725, %v723
  %v784 = vpack.c.bf16 %v728, %v726
  %v785 = vpack.c.bf16 %v729, %v727
  %v786 = vpack.c.bf16 %v732, %v730
  %v787 = vpack.c.bf16 %v733, %v731
  %v788 = vpack.c.bf16 %v736, %v734
  %v789 = vpack.c.bf16 %v737, %v735
  %v790 = vpack.c.bf16 %v740, %v738
  %v791 = vpack.c.bf16 %v741, %v739
  %v792 = vpack.c.bf16 %v744, %v742
  %v793 = vpack.c.bf16 %v745, %v743
  %v794 = vpack.c.bf16 %v748, %v746
  %v795 = vpack.c.bf16 %v749, %v747
  %v796 = vpack.c.bf16 %v752, %v750
  %v797 = vpack.c.bf16 %v753, %v751
  %v798 = vpack.c.bf16 %v756, %v754
  %v799 = vpack.c.bf16 %v757, %v755
  %v800 = vpack.c.bf16 %v760, %v758
  %v801 = vpack.c.bf16 %v761, %v759
  %v802 = vpack.c.bf16 %v764, %v762
  %v803 = vpack.c.bf16 %v765, %v763
  %v804 = vpack.c.bf16 %v768, %v766
  %v805 = vpack.c.bf16 %v769, %v767
  %v806 = vpack.c.bf16 %v772, %v770
  %v807 = vpack.c.bf16 %v773, %v771
  %v808 = vpack.c.bf16 %v776, %v774
  %v809 = vpack.c.bf16 %v777, %v775
  %v810 = vld [vmem:[%s5] sm:$0xff]
  %v811 = vld [vmem:[%s5 + $0x8] sm:$0xff]
  %v812 = vld [vmem:[%s5 + $0x10] sm:$0xff]
  %v813 = vld [vmem:[%s5 + $0x18] sm:$0xff]
  %v814 = vld [vmem:[%s5 + $0x20] sm:$0xff]
  %v815 = vld [vmem:[%s5 + $0x28] sm:$0xff]
  %v816 = vld [vmem:[%s5 + $0x30] sm:$0xff]
  %v817 = vld [vmem:[%s5 + $0x38] sm:$0xff]
  %v818 = vld [vmem:[%s5 + $0x40] sm:$0xff]
  %v819 = vld [vmem:[%s5 + $0x48] sm:$0xff]
  %v820 = vld [vmem:[%s5 + $0x50] sm:$0xff]
  %v821 = vld [vmem:[%s5 + $0x58] sm:$0xff]
  %v822 = vld [vmem:[%s5 + $0x60] sm:$0xff]
  %v823 = vld [vmem:[%s5 + $0x68] sm:$0xff]
  %v824 = vld [vmem:[%s5 + $0x70] sm:$0xff]
  %v825 = vld [vmem:[%s5 + $0x78] sm:$0xff]
  %v826 = vld [vmem:[%s5 + $0x80] sm:$0xff]
  %v827 = vld [vmem:[%s5 + $0x88] sm:$0xff]
  %v828 = vld [vmem:[%s5 + $0x90] sm:$0xff]
  %v829 = vld [vmem:[%s5 + $0x98] sm:$0xff]
  %v830 = vld [vmem:[%s5 + $0xa0] sm:$0xff]
  %v831 = vld [vmem:[%s5 + $0xa8] sm:$0xff]
  %v832 = vld [vmem:[%s5 + $0xb0] sm:$0xff]
  %v833 = vld [vmem:[%s5 + $0xb8] sm:$0xff]
  %v834 = vld [vmem:[%s5 + $0xc0] sm:$0xff]
  %v835 = vld [vmem:[%s5 + $0xc8] sm:$0xff]
  %v836 = vld [vmem:[%s5 + $0xd0] sm:$0xff]
  %v837 = vld [vmem:[%s5 + $0xd8] sm:$0xff]
  %v838 = vld [vmem:[%s5 + $0xe0] sm:$0xff]
  %v839 = vld [vmem:[%s5 + $0xe8] sm:$0xff]
  %v840 = vld [vmem:[%s5 + $0xf0] sm:$0xff]
  %v841 = vld [vmem:[%s5 + $0xf8] sm:$0xff]
  %v842 = vld [vmem:[%s6] sm:$0x3]
  %v844 = vlaneseq
  %v845 = vshrl.u32 %v844, 7
  %v846 = vsub.s32 0, %v845
  %v847 = vrot.slane %v842, %v846
  %v848 = vlaneseq
  %v849 = vshrl.u32 %v848, 7
  %v850 = vsub.s32 1, %v849
  %v851 = vrot.slane %v842, %v850
  %v886 = vunpack.c.l.b16 %v810
  %v887 = vunpack.c.h.b16 %v810
  %v888 = vunpack.c.l.b16 %v811
  %v889 = vunpack.c.h.b16 %v811
  %v890 = vunpack.c.l.b16 %v812
  %v891 = vunpack.c.h.b16 %v812
  %v892 = vunpack.c.l.b16 %v813
  %v893 = vunpack.c.h.b16 %v813
  %v894 = vunpack.c.l.b16 %v814
  %v895 = vunpack.c.h.b16 %v814
  %v896 = vunpack.c.l.b16 %v815
  %v897 = vunpack.c.h.b16 %v815
  %v898 = vunpack.c.l.b16 %v816
  %v899 = vunpack.c.h.b16 %v816
  %v900 = vunpack.c.l.b16 %v817
  %v901 = vunpack.c.h.b16 %v817
  %v902 = vunpack.c.l.b16 %v818
  %v903 = vunpack.c.h.b16 %v818
  %v904 = vunpack.c.l.b16 %v819
  %v905 = vunpack.c.h.b16 %v819
  %v906 = vunpack.c.l.b16 %v820
  %v907 = vunpack.c.h.b16 %v820
  %v908 = vunpack.c.l.b16 %v821
  %v909 = vunpack.c.h.b16 %v821
  %v910 = vunpack.c.l.b16 %v822
  %v911 = vunpack.c.h.b16 %v822
  %v912 = vunpack.c.l.b16 %v823
  %v913 = vunpack.c.h.b16 %v823
  %v914 = vunpack.c.l.b16 %v824
  %v915 = vunpack.c.h.b16 %v824
  %v916 = vunpack.c.l.b16 %v825
  %v917 = vunpack.c.h.b16 %v825
  %v918 = vunpack.c.l.b16 %v826
  %v919 = vunpack.c.h.b16 %v826
  %v920 = vunpack.c.l.b16 %v827
  %v921 = vunpack.c.h.b16 %v827
  %v922 = vunpack.c.l.b16 %v828
  %v923 = vunpack.c.h.b16 %v828
  %v924 = vunpack.c.l.b16 %v829
  %v925 = vunpack.c.h.b16 %v829
  %v926 = vunpack.c.l.b16 %v830
  %v927 = vunpack.c.h.b16 %v830
  %v928 = vunpack.c.l.b16 %v831
  %v929 = vunpack.c.h.b16 %v831
  %v930 = vunpack.c.l.b16 %v832
  %v931 = vunpack.c.h.b16 %v832
  %v932 = vunpack.c.l.b16 %v833
  %v933 = vunpack.c.h.b16 %v833
  %v934 = vunpack.c.l.b16 %v834
  %v935 = vunpack.c.h.b16 %v834
  %v936 = vunpack.c.l.b16 %v835
  %v937 = vunpack.c.h.b16 %v835
  %v938 = vunpack.c.l.b16 %v836
  %v939 = vunpack.c.h.b16 %v836
  %v940 = vunpack.c.l.b16 %v837
  %v941 = vunpack.c.h.b16 %v837
  %v942 = vunpack.c.l.b16 %v838
  %v943 = vunpack.c.h.b16 %v838
  %v944 = vunpack.c.l.b16 %v839
  %v945 = vunpack.c.h.b16 %v839
  %v946 = vunpack.c.l.b16 %v840
  %v947 = vunpack.c.h.b16 %v840
  %v948 = vunpack.c.l.b16 %v841
  %v949 = vunpack.c.h.b16 %v841
  %v950 = vpack.c.b16 %v888, %v886
  %v951 = vpack.c.b16 %v889, %v887
  %v952 = vpack.c.b16 %v892, %v890
  %v953 = vpack.c.b16 %v893, %v891
  %v954 = vpack.c.b16 %v896, %v894
  %v955 = vpack.c.b16 %v897, %v895
  %v956 = vpack.c.b16 %v900, %v898
  %v957 = vpack.c.b16 %v901, %v899
  %v958 = vpack.c.b16 %v904, %v902
  %v959 = vpack.c.b16 %v905, %v903
  %v960 = vpack.c.b16 %v908, %v906
  %v961 = vpack.c.b16 %v909, %v907
  %v962 = vpack.c.b16 %v912, %v910
  %v963 = vpack.c.b16 %v913, %v911
  %v964 = vpack.c.b16 %v916, %v914
  %v965 = vpack.c.b16 %v917, %v915
  %v966 = vpack.c.b16 %v920, %v918
  %v967 = vpack.c.b16 %v921, %v919
  %v968 = vpack.c.b16 %v924, %v922
  %v969 = vpack.c.b16 %v925, %v923
  %v970 = vpack.c.b16 %v928, %v926
  %v971 = vpack.c.b16 %v929, %v927
  %v972 = vpack.c.b16 %v932, %v930
  %v973 = vpack.c.b16 %v933, %v931
  %v974 = vpack.c.b16 %v936, %v934
  %v975 = vpack.c.b16 %v937, %v935
  %v976 = vpack.c.b16 %v940, %v938
  %v977 = vpack.c.b16 %v941, %v939
  %v978 = vpack.c.b16 %v944, %v942
  %v979 = vpack.c.b16 %v945, %v943
  %v980 = vpack.c.b16 %v948, %v946
  %v981 = vpack.c.b16 %v949, %v947
  %1014 = vmatprep.subr.bf16.mxu0 %v965
  %1015 = vmatpush1.bf16.msra.mxu0 %v964
  %1016 = vmatprep.subr.bf16.mxu0 %v963
  %1017 = vmatpush1.bf16.msra.mxu0 %v962
  %1018 = vmatprep.subr.bf16.mxu0 %v961
  %1019 = vmatpush1.bf16.msra.mxu0 %v960
  %1020 = vmatprep.subr.bf16.mxu0 %v959
  %1021 = vmatpush1.bf16.msra.mxu0 %v958
  %1022 = vmatprep.subr.bf16.mxu0 %v957
  %1023 = vmatpush1.bf16.msra.mxu0 %v956
  %1024 = vmatprep.subr.bf16.mxu0 %v955
  %1025 = vmatpush1.bf16.msra.mxu0 %v954
  %1026 = vmatprep.subr.bf16.mxu0 %v953
  %1027 = vmatpush1.bf16.msra.mxu0 %v952
  %1028 = vmatprep.subr.bf16.mxu0 %v951
  %1029 = vmatpush1.bf16.msra.mxu0 %v950
  %1030 = vmatprep.subr.bf16.mxu0 %v981
  %1031 = vmatpush2.bf16.msra.mxu0 %v980
  %1032 = vmatprep.subr.bf16.mxu0 %v979
  %1033 = vmatpush2.bf16.msra.mxu0 %v978
  %1034 = vmatprep.subr.bf16.mxu0 %v977
  %1035 = vmatpush2.bf16.msra.mxu0 %v976
  %1036 = vmatprep.subr.bf16.mxu0 %v975
  %1037 = vmatpush2.bf16.msra.mxu0 %v974
  %1038 = vmatprep.subr.bf16.mxu0 %v973
  %1039 = vmatpush2.bf16.msra.mxu0 %v972
  %1040 = vmatprep.subr.bf16.mxu0 %v971
  %1041 = vmatpush2.bf16.msra.mxu0 %v970
  %1042 = vmatprep.subr.bf16.mxu0 %v969
  %1043 = vmatpush2.bf16.msra.mxu0 %v968
  %1044 = vmatprep.subr.bf16.mxu0 %v967
  %1045 = vmatpush2.bf16.msra.mxu0 %v966
  %1046 = vmatprep.mubr.bf16.mxu0 %v779
  %1047 = vmatmul.mubr.bf16.gmra.mxu0 %v778
  %v1048 = vpop.f32.mrf.mxu0
  %v1049 = vadd.f32 %v847, %v1048
  %v1050 = vpop.f32.mrf.mxu0
  %v1051 = vadd.f32 %v851, %v1050
  %v1052 = vpop.f32.mrf.mxu0
  %v1053 = vadd.f32 %v847, %v1052
  %v1054 = vpop.f32.mrf.mxu0
  %v1055 = vadd.f32 %v851, %v1054
  %1056 = vmatprep.mubr.bf16.mxu0 %v781
  %1057 = vmatmul.mubr.bf16.gmra.mxu0 %v780
  %v1058 = vpop.f32.mrf.mxu0
  %v1059 = vadd.f32 %v847, %v1058
  %v1060 = vpop.f32.mrf.mxu0
  %v1061 = vadd.f32 %v851, %v1060
  %v1062 = vpop.f32.mrf.mxu0
  %v1063 = vadd.f32 %v847, %v1062
  %v1064 = vpop.f32.mrf.mxu0
  %v1065 = vadd.f32 %v851, %v1064
  %1066 = vmatprep.mubr.bf16.mxu0 %v783
  %1067 = vmatmul.mubr.bf16.gmra.mxu0 %v782
  %v1068 = vpop.f32.mrf.mxu0
  %v1069 = vadd.f32 %v847, %v1068
  %v1070 = vpop.f32.mrf.mxu0
  %v1071 = vadd.f32 %v851, %v1070
  %v1072 = vpop.f32.mrf.mxu0
  %v1073 = vadd.f32 %v847, %v1072
  %v1074 = vpop.f32.mrf.mxu0
  %v1075 = vadd.f32 %v851, %v1074
  %1076 = vmatprep.mubr.bf16.mxu0 %v785
  %1077 = vmatmul.mubr.bf16.gmra.mxu0 %v784
  %v1078 = vpop.f32.mrf.mxu0
  %v1079 = vadd.f32 %v847, %v1078
  %v1080 = vpop.f32.mrf.mxu0
  %v1081 = vadd.f32 %v851, %v1080
  %v1082 = vpop.f32.mrf.mxu0
  %v1083 = vadd.f32 %v847, %v1082
  %v1084 = vpop.f32.mrf.mxu0
  %v1085 = vadd.f32 %v851, %v1084
  %1086 = vmatprep.mubr.bf16.mxu0 %v787
  %1087 = vmatmul.mubr.bf16.gmra.mxu0 %v786
  %v1088 = vpop.f32.mrf.mxu0
  %v1089 = vadd.f32 %v847, %v1088
  %v1090 = vpop.f32.mrf.mxu0
  %v1091 = vadd.f32 %v851, %v1090
  %v1092 = vpop.f32.mrf.mxu0
  %v1093 = vadd.f32 %v847, %v1092
  %v1094 = vpop.f32.mrf.mxu0
  %v1095 = vadd.f32 %v851, %v1094
  %1096 = vmatprep.mubr.bf16.mxu0 %v789
  %1097 = vmatmul.mubr.bf16.gmra.mxu0 %v788
  %v1098 = vpop.f32.mrf.mxu0
  %v1099 = vadd.f32 %v847, %v1098
  %v1100 = vpop.f32.mrf.mxu0
  %v1101 = vadd.f32 %v851, %v1100
  %v1102 = vpop.f32.mrf.mxu0
  %v1103 = vadd.f32 %v847, %v1102
  %v1104 = vpop.f32.mrf.mxu0
  %v1105 = vadd.f32 %v851, %v1104
  %1106 = vmatprep.mubr.bf16.mxu0 %v791
  %1107 = vmatmul.mubr.bf16.gmra.mxu0 %v790
  %v1108 = vpop.f32.mrf.mxu0
  %v1109 = vadd.f32 %v847, %v1108
  %v1110 = vpop.f32.mrf.mxu0
  %v1111 = vadd.f32 %v851, %v1110
  %v1112 = vpop.f32.mrf.mxu0
  %v1113 = vadd.f32 %v847, %v1112
  %v1114 = vpop.f32.mrf.mxu0
  %v1115 = vadd.f32 %v851, %v1114
  %1116 = vmatprep.mubr.bf16.mxu0 %v793
  %1117 = vmatmul.mubr.bf16.gmra.mxu0 %v792
  %v1118 = vpop.f32.mrf.mxu0
  %v1119 = vadd.f32 %v847, %v1118
  %v1120 = vpop.f32.mrf.mxu0
  %v1121 = vadd.f32 %v851, %v1120
  %v1122 = vpop.f32.mrf.mxu0
  %v1123 = vadd.f32 %v847, %v1122
  %v1124 = vpop.f32.mrf.mxu0
  %v1125 = vadd.f32 %v851, %v1124
  %1126 = vmatprep.mubr.bf16.mxu0 %v795
  %1127 = vmatmul.mubr.bf16.gmra.mxu0 %v794
  %v1128 = vpop.f32.mrf.mxu0
  %v1129 = vadd.f32 %v847, %v1128
  %v1130 = vpop.f32.mrf.mxu0
  %v1131 = vadd.f32 %v851, %v1130
  %v1132 = vpop.f32.mrf.mxu0
  %v1133 = vadd.f32 %v847, %v1132
  %v1134 = vpop.f32.mrf.mxu0
  %v1135 = vadd.f32 %v851, %v1134
  %1136 = vmatprep.mubr.bf16.mxu0 %v797
  %1137 = vmatmul.mubr.bf16.gmra.mxu0 %v796
  %v1138 = vpop.f32.mrf.mxu0
  %v1139 = vadd.f32 %v847, %v1138
  %v1140 = vpop.f32.mrf.mxu0
  %v1141 = vadd.f32 %v851, %v1140
  %v1142 = vpop.f32.mrf.mxu0
  %v1143 = vadd.f32 %v847, %v1142
  %v1144 = vpop.f32.mrf.mxu0
  %v1145 = vadd.f32 %v851, %v1144
  %1146 = vmatprep.mubr.bf16.mxu0 %v799
  %1147 = vmatmul.mubr.bf16.gmra.mxu0 %v798
  %v1148 = vpop.f32.mrf.mxu0
  %v1149 = vadd.f32 %v847, %v1148
  %v1150 = vpop.f32.mrf.mxu0
  %v1151 = vadd.f32 %v851, %v1150
  %v1152 = vpop.f32.mrf.mxu0
  %v1153 = vadd.f32 %v847, %v1152
  %v1154 = vpop.f32.mrf.mxu0
  %v1155 = vadd.f32 %v851, %v1154
  %1156 = vmatprep.mubr.bf16.mxu0 %v801
  %1157 = vmatmul.mubr.bf16.gmra.mxu0 %v800
  %v1158 = vpop.f32.mrf.mxu0
  %v1159 = vadd.f32 %v847, %v1158
  %v1160 = vpop.f32.mrf.mxu0
  %v1161 = vadd.f32 %v851, %v1160
  %v1162 = vpop.f32.mrf.mxu0
  %v1163 = vadd.f32 %v847, %v1162
  %v1164 = vpop.f32.mrf.mxu0
  %v1165 = vadd.f32 %v851, %v1164
  %1166 = vmatprep.mubr.bf16.mxu0 %v803
  %1167 = vmatmul.mubr.bf16.gmra.mxu0 %v802
  %v1168 = vpop.f32.mrf.mxu0
  %v1169 = vadd.f32 %v847, %v1168
  %v1170 = vpop.f32.mrf.mxu0
  %v1171 = vadd.f32 %v851, %v1170
  %v1172 = vpop.f32.mrf.mxu0
  %v1173 = vadd.f32 %v847, %v1172
  %v1174 = vpop.f32.mrf.mxu0
  %v1175 = vadd.f32 %v851, %v1174
  %1176 = vmatprep.mubr.bf16.mxu0 %v805
  %1177 = vmatmul.mubr.bf16.gmra.mxu0 %v804
  %v1178 = vpop.f32.mrf.mxu0
  %v1179 = vadd.f32 %v847, %v1178
  %v1180 = vpop.f32.mrf.mxu0
  %v1181 = vadd.f32 %v851, %v1180
  %v1182 = vpop.f32.mrf.mxu0
  %v1183 = vadd.f32 %v847, %v1182
  %v1184 = vpop.f32.mrf.mxu0
  %v1185 = vadd.f32 %v851, %v1184
  %1186 = vmatprep.mubr.bf16.mxu0 %v807
  %1187 = vmatmul.mubr.bf16.gmra.mxu0 %v806
  %v1188 = vpop.f32.mrf.mxu0
  %v1189 = vadd.f32 %v847, %v1188
  %v1190 = vpop.f32.mrf.mxu0
  %v1191 = vadd.f32 %v851, %v1190
  %v1192 = vpop.f32.mrf.mxu0
  %v1193 = vadd.f32 %v847, %v1192
  %v1194 = vpop.f32.mrf.mxu0
  %v1195 = vadd.f32 %v851, %v1194
  %1196 = vmatprep.mubr.bf16.mxu0 %v809
  %1197 = vmatmul.mubr.bf16.gmra.mxu0 %v808
  %v1198 = vpop.f32.mrf.mxu0
  %v1199 = vadd.f32 %v847, %v1198
  %v1200 = vpop.f32.mrf.mxu0
  %v1201 = vadd.f32 %v851, %v1200
  %v1202 = vpop.f32.mrf.mxu0
  %v1203 = vadd.f32 %v847, %v1202
  %v1204 = vpop.f32.mrf.mxu0
  %v1205 = vadd.f32 %v851, %v1204
  %1206 = vdwg.mxu0
  %v1207 = vmax.f32 %v1049, 0.0
  %v1208 = vmax.f32 %v1051, 0.0
  %v1209 = vmax.f32 %v1053, 0.0
  %v1210 = vmax.f32 %v1055, 0.0
  %v1211 = vmax.f32 %v1059, 0.0
  %v1212 = vmax.f32 %v1061, 0.0
  %v1213 = vmax.f32 %v1063, 0.0
  %v1214 = vmax.f32 %v1065, 0.0
  %v1215 = vmax.f32 %v1069, 0.0
  %v1216 = vmax.f32 %v1071, 0.0
  %v1217 = vmax.f32 %v1073, 0.0
  %v1218 = vmax.f32 %v1075, 0.0
  %v1219 = vmax.f32 %v1079, 0.0
  %v1220 = vmax.f32 %v1081, 0.0
  %v1221 = vmax.f32 %v1083, 0.0
  %v1222 = vmax.f32 %v1085, 0.0
  %v1223 = vmax.f32 %v1089, 0.0
  %v1224 = vmax.f32 %v1091, 0.0
  %v1225 = vmax.f32 %v1093, 0.0
  %v1226 = vmax.f32 %v1095, 0.0
  %v1227 = vmax.f32 %v1099, 0.0
  %v1228 = vmax.f32 %v1101, 0.0
  %v1229 = vmax.f32 %v1103, 0.0
  %v1230 = vmax.f32 %v1105, 0.0
  %v1231 = vmax.f32 %v1109, 0.0
  %v1232 = vmax.f32 %v1111, 0.0
  %v1233 = vmax.f32 %v1113, 0.0
  %v1234 = vmax.f32 %v1115, 0.0
  %v1235 = vmax.f32 %v1119, 0.0
  %v1236 = vmax.f32 %v1121, 0.0
  %v1237 = vmax.f32 %v1123, 0.0
  %v1238 = vmax.f32 %v1125, 0.0
  %v1239 = vmax.f32 %v1129, 0.0
  %v1240 = vmax.f32 %v1131, 0.0
  %v1241 = vmax.f32 %v1133, 0.0
  %v1242 = vmax.f32 %v1135, 0.0
  %v1243 = vmax.f32 %v1139, 0.0
  %v1244 = vmax.f32 %v1141, 0.0
  %v1245 = vmax.f32 %v1143, 0.0
  %v1246 = vmax.f32 %v1145, 0.0
  %v1247 = vmax.f32 %v1149, 0.0
  %v1248 = vmax.f32 %v1151, 0.0
  %v1249 = vmax.f32 %v1153, 0.0
  %v1250 = vmax.f32 %v1155, 0.0
  %v1251 = vmax.f32 %v1159, 0.0
  %v1252 = vmax.f32 %v1161, 0.0
  %v1253 = vmax.f32 %v1163, 0.0
  %v1254 = vmax.f32 %v1165, 0.0
  %v1255 = vmax.f32 %v1169, 0.0
  %v1256 = vmax.f32 %v1171, 0.0
  %v1257 = vmax.f32 %v1173, 0.0
  %v1258 = vmax.f32 %v1175, 0.0
  %v1259 = vmax.f32 %v1179, 0.0
  %v1260 = vmax.f32 %v1181, 0.0
  %v1261 = vmax.f32 %v1183, 0.0
  %v1262 = vmax.f32 %v1185, 0.0
  %v1263 = vmax.f32 %v1189, 0.0
  %v1264 = vmax.f32 %v1191, 0.0
  %v1265 = vmax.f32 %v1193, 0.0
  %v1266 = vmax.f32 %v1195, 0.0
  %v1267 = vmax.f32 %v1199, 0.0
  %v1268 = vmax.f32 %v1201, 0.0
  %v1269 = vmax.f32 %v1203, 0.0
  %v1270 = vmax.f32 %v1205, 0.0
  %v1271 = vld [vmem:[%s7] sm:$0x3]
  %v1273 = vlaneseq
  %v1274 = vshrl.u32 %v1273, 7
  %v1275 = vsub.s32 0, %v1274
  %v1276 = vrot.slane %v1271, %v1275
  %v1277 = vlaneseq
  %v1278 = vshrl.u32 %v1277, 7
  %v1279 = vsub.s32 1, %v1278
  %v1280 = vrot.slane %v1271, %v1279
  %v1283 = vmul.f32 %v1207, %v1276
  %v1284 = vmul.f32 %v1208, %v1280
  %v1285 = vmul.f32 %v1209, %v1276
  %v1286 = vmul.f32 %v1210, %v1280
  %v1287 = vmul.f32 %v1211, %v1276
  %v1288 = vmul.f32 %v1212, %v1280
  %v1289 = vmul.f32 %v1213, %v1276
  %v1290 = vmul.f32 %v1214, %v1280
  %v1291 = vmul.f32 %v1215, %v1276
  %v1292 = vmul.f32 %v1216, %v1280
  %v1293 = vmul.f32 %v1217, %v1276
  %v1294 = vmul.f32 %v1218, %v1280
  %v1295 = vmul.f32 %v1219, %v1276
  %v1296 = vmul.f32 %v1220, %v1280
  %v1297 = vmul.f32 %v1221, %v1276
  %v1298 = vmul.f32 %v1222, %v1280
  %v1299 = vmul.f32 %v1223, %v1276
  %v1300 = vmul.f32 %v1224, %v1280
  %v1301 = vmul.f32 %v1225, %v1276
  %v1302 = vmul.f32 %v1226, %v1280
  %v1303 = vmul.f32 %v1227, %v1276
  %v1304 = vmul.f32 %v1228, %v1280
  %v1305 = vmul.f32 %v1229, %v1276
  %v1306 = vmul.f32 %v1230, %v1280
  %v1307 = vmul.f32 %v1231, %v1276
  %v1308 = vmul.f32 %v1232, %v1280
  %v1309 = vmul.f32 %v1233, %v1276
  %v1310 = vmul.f32 %v1234, %v1280
  %v1311 = vmul.f32 %v1235, %v1276
  %v1312 = vmul.f32 %v1236, %v1280
  %v1313 = vmul.f32 %v1237, %v1276
  %v1314 = vmul.f32 %v1238, %v1280
  %v1315 = vmul.f32 %v1239, %v1276
  %v1316 = vmul.f32 %v1240, %v1280
  %v1317 = vmul.f32 %v1241, %v1276
  %v1318 = vmul.f32 %v1242, %v1280
  %v1319 = vmul.f32 %v1243, %v1276
  %v1320 = vmul.f32 %v1244, %v1280
  %v1321 = vmul.f32 %v1245, %v1276
  %v1322 = vmul.f32 %v1246, %v1280
  %v1323 = vmul.f32 %v1247, %v1276
  %v1324 = vmul.f32 %v1248, %v1280
  %v1325 = vmul.f32 %v1249, %v1276
  %v1326 = vmul.f32 %v1250, %v1280
  %v1327 = vmul.f32 %v1251, %v1276
  %v1328 = vmul.f32 %v1252, %v1280
  %v1329 = vmul.f32 %v1253, %v1276
  %v1330 = vmul.f32 %v1254, %v1280
  %v1331 = vmul.f32 %v1255, %v1276
  %v1332 = vmul.f32 %v1256, %v1280
  %v1333 = vmul.f32 %v1257, %v1276
  %v1334 = vmul.f32 %v1258, %v1280
  %v1335 = vmul.f32 %v1259, %v1276
  %v1336 = vmul.f32 %v1260, %v1280
  %v1337 = vmul.f32 %v1261, %v1276
  %v1338 = vmul.f32 %v1262, %v1280
  %v1339 = vmul.f32 %v1263, %v1276
  %v1340 = vmul.f32 %v1264, %v1280
  %v1341 = vmul.f32 %v1265, %v1276
  %v1342 = vmul.f32 %v1266, %v1280
  %v1343 = vmul.f32 %v1267, %v1276
  %v1344 = vmul.f32 %v1268, %v1280
  %v1345 = vmul.f32 %v1269, %v1276
  %v1346 = vmul.f32 %v1270, %v1280
  %v1347 = vadd.f32 %v1283, %v1284
  %1348 = vadd.xlane.f32.xlu0 %v1347
  %v1349 = vpop.xlane.xlu0 %1348
  %v1350 = vadd.f32 %v1285, %v1286
  %1351 = vadd.xlane.f32.xlu0 %v1350
  %v1352 = vpop.xlane.xlu0 %1351
  %v1353 = vadd.f32 %v1287, %v1288
  %1354 = vadd.xlane.f32.xlu0 %v1353
  %v1355 = vpop.xlane.xlu0 %1354
  %v1356 = vadd.f32 %v1289, %v1290
  %1357 = vadd.xlane.f32.xlu0 %v1356
  %v1358 = vpop.xlane.xlu0 %1357
  %v1359 = vadd.f32 %v1291, %v1292
  %1360 = vadd.xlane.f32.xlu0 %v1359
  %v1361 = vpop.xlane.xlu0 %1360
  %v1362 = vadd.f32 %v1293, %v1294
  %1363 = vadd.xlane.f32.xlu0 %v1362
  %v1364 = vpop.xlane.xlu0 %1363
  %v1365 = vadd.f32 %v1295, %v1296
  %1366 = vadd.xlane.f32.xlu0 %v1365
  %v1367 = vpop.xlane.xlu0 %1366
  %v1368 = vadd.f32 %v1297, %v1298
  %1369 = vadd.xlane.f32.xlu0 %v1368
  %v1370 = vpop.xlane.xlu0 %1369
  %v1371 = vadd.f32 %v1299, %v1300
  %1372 = vadd.xlane.f32.xlu0 %v1371
  %v1373 = vpop.xlane.xlu0 %1372
  %v1374 = vadd.f32 %v1301, %v1302
  %1375 = vadd.xlane.f32.xlu0 %v1374
  %v1376 = vpop.xlane.xlu0 %1375
  %v1377 = vadd.f32 %v1303, %v1304
  %1378 = vadd.xlane.f32.xlu0 %v1377
  %v1379 = vpop.xlane.xlu0 %1378
  %v1380 = vadd.f32 %v1305, %v1306
  %1381 = vadd.xlane.f32.xlu0 %v1380
  %v1382 = vpop.xlane.xlu0 %1381
  %v1383 = vadd.f32 %v1307, %v1308
  %1384 = vadd.xlane.f32.xlu0 %v1383
  %v1385 = vpop.xlane.xlu0 %1384
  %v1386 = vadd.f32 %v1309, %v1310
  %1387 = vadd.xlane.f32.xlu0 %v1386
  %v1388 = vpop.xlane.xlu0 %1387
  %v1389 = vadd.f32 %v1311, %v1312
  %1390 = vadd.xlane.f32.xlu0 %v1389
  %v1391 = vpop.xlane.xlu0 %1390
  %v1392 = vadd.f32 %v1313, %v1314
  %1393 = vadd.xlane.f32.xlu0 %v1392
  %v1394 = vpop.xlane.xlu0 %1393
  %v1395 = vadd.f32 %v1315, %v1316
  %1396 = vadd.xlane.f32.xlu0 %v1395
  %v1397 = vpop.xlane.xlu0 %1396
  %v1398 = vadd.f32 %v1317, %v1318
  %1399 = vadd.xlane.f32.xlu0 %v1398
  %v1400 = vpop.xlane.xlu0 %1399
  %v1401 = vadd.f32 %v1319, %v1320
  %1402 = vadd.xlane.f32.xlu0 %v1401
  %v1403 = vpop.xlane.xlu0 %1402
  %v1404 = vadd.f32 %v1321, %v1322
  %1405 = vadd.xlane.f32.xlu0 %v1404
  %v1406 = vpop.xlane.xlu0 %1405
  %v1407 = vadd.f32 %v1323, %v1324
  %1408 = vadd.xlane.f32.xlu0 %v1407
  %v1409 = vpop.xlane.xlu0 %1408
  %v1410 = vadd.f32 %v1325, %v1326
  %1411 = vadd.xlane.f32.xlu0 %v1410
  %v1412 = vpop.xlane.xlu0 %1411
  %v1413 = vadd.f32 %v1327, %v1328
  %1414 = vadd.xlane.f32.xlu0 %v1413
  %v1415 = vpop.xlane.xlu0 %1414
  %v1416 = vadd.f32 %v1329, %v1330
  %1417 = vadd.xlane.f32.xlu0 %v1416
  %v1418 = vpop.xlane.xlu0 %1417
  %v1419 = vadd.f32 %v1331, %v1332
  %1420 = vadd.xlane.f32.xlu0 %v1419
  %v1421 = vpop.xlane.xlu0 %1420
  %v1422 = vadd.f32 %v1333, %v1334
  %1423 = vadd.xlane.f32.xlu0 %v1422
  %v1424 = vpop.xlane.xlu0 %1423
  %v1425 = vadd.f32 %v1335, %v1336
  %1426 = vadd.xlane.f32.xlu0 %v1425
  %v1427 = vpop.xlane.xlu0 %1426
  %v1428 = vadd.f32 %v1337, %v1338
  %1429 = vadd.xlane.f32.xlu0 %v1428
  %v1430 = vpop.xlane.xlu0 %1429
  %v1431 = vadd.f32 %v1339, %v1340
  %1432 = vadd.xlane.f32.xlu0 %v1431
  %v1433 = vpop.xlane.xlu0 %1432
  %v1434 = vadd.f32 %v1341, %v1342
  %1435 = vadd.xlane.f32.xlu0 %v1434
  %v1436 = vpop.xlane.xlu0 %1435
  %v1437 = vadd.f32 %v1343, %v1344
  %1438 = vadd.xlane.f32.xlu0 %v1437
  %v1439 = vpop.xlane.xlu0 %1438
  %v1440 = vadd.f32 %v1345, %v1346
  %1441 = vadd.xlane.f32.xlu0 %v1440
  %v1442 = vpop.xlane.xlu0 %1441
  %v1443 = vld [vmem:[#allocation2] sm:$0x1]
  %v1445 = vlaneseq
  %v1446 = vshrl.u32 %v1445, 7
  %v1447 = vsub.s32 0, %v1446
  %v1448 = vrot.slane %v1443, %v1447
  %v1450 = vadd.f32 %v1349, %v1448
  %v1451 = vadd.f32 %v1352, %v1448
  %v1452 = vadd.f32 %v1355, %v1448
  %v1453 = vadd.f32 %v1358, %v1448
  %v1454 = vadd.f32 %v1361, %v1448
  %v1455 = vadd.f32 %v1364, %v1448
  %v1456 = vadd.f32 %v1367, %v1448
  %v1457 = vadd.f32 %v1370, %v1448
  %v1458 = vadd.f32 %v1373, %v1448
  %v1459 = vadd.f32 %v1376, %v1448
  %v1460 = vadd.f32 %v1379, %v1448
  %v1461 = vadd.f32 %v1382, %v1448
  %v1462 = vadd.f32 %v1385, %v1448
  %v1463 = vadd.f32 %v1388, %v1448
  %v1464 = vadd.f32 %v1391, %v1448
  %v1465 = vadd.f32 %v1394, %v1448
  %v1466 = vadd.f32 %v1397, %v1448
  %v1467 = vadd.f32 %v1400, %v1448
  %v1468 = vadd.f32 %v1403, %v1448
  %v1469 = vadd.f32 %v1406, %v1448
  %v1470 = vadd.f32 %v1409, %v1448
  %v1471 = vadd.f32 %v1412, %v1448
  %v1472 = vadd.f32 %v1415, %v1448
  %v1473 = vadd.f32 %v1418, %v1448
  %v1474 = vadd.f32 %v1421, %v1448
  %v1475 = vadd.f32 %v1424, %v1448
  %v1476 = vadd.f32 %v1427, %v1448
  %v1477 = vadd.f32 %v1430, %v1448
  %v1478 = vadd.f32 %v1433, %v1448
  %v1479 = vadd.f32 %v1436, %v1448
  %v1480 = vadd.f32 %v1439, %v1448
  %v1481 = vadd.f32 %v1442, %v1448
  %vm1482 = vcmask 7168
  %1483 = vst.msk [vmem:[%s9] sm:$0xff] %vm1482, %v1450
  %1484 = vst.msk [vmem:[%s9 + $0x8] sm:$0xff] %vm1482, %v1451
  %1485 = vst.msk [vmem:[%s9 + $0x10] sm:$0xff] %vm1482, %v1452
  %1486 = vst.msk [vmem:[%s9 + $0x18] sm:$0xff] %vm1482, %v1453
  %1487 = vst.msk [vmem:[%s9 + $0x20] sm:$0xff] %vm1482, %v1454
  %1488 = vst.msk [vmem:[%s9 + $0x28] sm:$0xff] %vm1482, %v1455
  %1489 = vst.msk [vmem:[%s9 + $0x30] sm:$0xff] %vm1482, %v1456
  %1490 = vst.msk [vmem:[%s9 + $0x38] sm:$0xff] %vm1482, %v1457
  %1491 = vst.msk [vmem:[%s9 + $0x40] sm:$0xff] %vm1482, %v1458
  %1492 = vst.msk [vmem:[%s9 + $0x48] sm:$0xff] %vm1482, %v1459
  %1493 = vst.msk [vmem:[%s9 + $0x50] sm:$0xff] %vm1482, %v1460
  %1494 = vst.msk [vmem:[%s9 + $0x58] sm:$0xff] %vm1482, %v1461
  %1495 = vst.msk [vmem:[%s9 + $0x60] sm:$0xff] %vm1482, %v1462
  %1496 = vst.msk [vmem:[%s9 + $0x68] sm:$0xff] %vm1482, %v1463
  %1497 = vst.msk [vmem:[%s9 + $0x70] sm:$0xff] %vm1482, %v1464
  %1498 = vst.msk [vmem:[%s9 + $0x78] sm:$0xff] %vm1482, %v1465
  %1499 = vst.msk [vmem:[%s9 + $0x80] sm:$0xff] %vm1482, %v1466
  %1500 = vst.msk [vmem:[%s9 + $0x88] sm:$0xff] %vm1482, %v1467
  %1501 = vst.msk [vmem:[%s9 + $0x90] sm:$0xff] %vm1482, %v1468
  %1502 = vst.msk [vmem:[%s9 + $0x98] sm:$0xff] %vm1482, %v1469
  %1503 = vst.msk [vmem:[%s9 + $0xa0] sm:$0xff] %vm1482, %v1470
  %1504 = vst.msk [vmem:[%s9 + $0xa8] sm:$0xff] %vm1482, %v1471
  %1505 = vst.msk [vmem:[%s9 + $0xb0] sm:$0xff] %vm1482, %v1472
  %1506 = vst.msk [vmem:[%s9 + $0xb8] sm:$0xff] %vm1482, %v1473
  %1507 = vst.msk [vmem:[%s9 + $0xc0] sm:$0xff] %vm1482, %v1474
  %1508 = vst.msk [vmem:[%s9 + $0xc8] sm:$0xff] %vm1482, %v1475
  %1509 = vst.msk [vmem:[%s9 + $0xd0] sm:$0xff] %vm1482, %v1476
  %1510 = vst.msk [vmem:[%s9 + $0xd8] sm:$0xff] %vm1482, %v1477
  %1511 = vst.msk [vmem:[%s9 + $0xe0] sm:$0xff] %vm1482, %v1478
  %1512 = vst.msk [vmem:[%s9 + $0xe8] sm:$0xff] %vm1482, %v1479
  %1513 = vst.msk [vmem:[%s9 + $0xf0] sm:$0xff] %vm1482, %v1480
  %1514 = vst.msk [vmem:[%s9 + $0xf8] sm:$0xff] %vm1482, %v1481
  // Predicated region
  $region38: #{tpu_custom_call.1} parent=0 // pred_check
    _
  $region39: #{tpu_custom_call.1} parent=0 // pred_check_branch
    %1516 = sbr.rel (0) target = $region41
  $region40: #{tpu_custom_call.1} parent=0 // pred_region
    _
  $region41: #{tpu_custom_call.1} parent=0 // pred_fallthru
    _
  // Predicated region
  $region42: #{tpu_custom_call.1} parent=0 // pred_check
    _
  $region43: #{tpu_custom_call.1} parent=0 // pred_check_branch
    %1518 = sbr.rel (0) target = $region45
  $region44: #{tpu_custom_call.1} parent=0 // pred_region
    _
  $region45: #{tpu_custom_call.1} parent=0 // pred_fallthru
    _

</llo_original>
